<compile_context>
chip_gen: v7x
topology: tpu7x:2x2x1
jax: 0.10.0
libtpu: 0.0.40
codegen_flags: <defaults>
</compile_context>

<pallas_src>
import functools

import jax
import jax.numpy as jnp
from jax import lax
from jax.experimental import pallas as pl
from jax.experimental.pallas import tpu as pltpu


def _elu(v):
    # nn.ELU(alpha=1): x if x > 0 else exp(x) - 1
    return jnp.where(v > 0, v, jnp.exp(v) - 1.0)


def _pad2d(v, top, bottom, left, right):
    """Zero-pad a 2-D value with dense concatenates (skips zero-size pieces)."""
    h, _ = v.shape
    row_parts = []
    if left:
        row_parts.append(jnp.zeros((h, left), v.dtype))
    row_parts.append(v)
    if right:
        row_parts.append(jnp.zeros((h, right), v.dtype))
    row = row_parts[0] if len(row_parts) == 1 else jnp.concatenate(row_parts, axis=1)
    col_parts = []
    if top:
        col_parts.append(jnp.zeros((top, row.shape[1]), v.dtype))
    col_parts.append(row)
    if bottom:
        col_parts.append(jnp.zeros((bottom, row.shape[1]), v.dtype))
    return col_parts[0] if len(col_parts) == 1 else jnp.concatenate(col_parts, axis=0)


def _replk_kernel(x_ref, tbk_ref, bbk_ref, w1b_ref, b1_ref, t3_ref, b2_ref,
                  o_ref, *, K, H, W, OH, OW, Cin, Cout, pad_t, pad_l):
    f32 = jnp.float32
    x = x_ref[...]                                            # (H, W*Cin)

    # ---- left branch: BN1 folded into weights; 13x13 VALID conv as K
    #      accumulated row-band matmuls; ELU ------------------------------
    lacc = jnp.zeros((OH, OW * Cout), f32)
    for kh in range(K):
        lacc = lacc + jnp.dot(x[kh:kh + OH, :], tbk_ref[kh],
                              preferred_element_type=f32)
    lout = _elu(lacc + bbk_ref[...])                          # (OH, OW*Cout)

    # ---- right branch: BN2 folded; 1x1 conv as one block-diagonal matmul ---
    r1 = jnp.dot(x, w1b_ref[...], preferred_element_type=f32) + b1_ref[...]

    # zero padding=1 for the 3x3 conv, built densely in registers
    zc = jnp.zeros((H, Cin), f32)
    zr = jnp.zeros((1, (W + 2) * Cin), f32)
    rpad = jnp.concatenate(
        [zr, jnp.concatenate([zc, r1, zc], axis=1), zr], axis=0)  # (H+2,(W+2)*Cin)

    # 3x3 (pad=1) conv as 3 accumulated row-band matmuls; ELU
    racc = jnp.zeros((H, W * Cout), f32)
    for kh in range(3):
        racc = racc + jnp.dot(rpad[kh:kh + H, :], t3_ref[kh],
                              preferred_element_type=f32)
    rout = _elu(racc + b2_ref[...])                           # (H, W*Cout)

    # ---- reparameter(): zero-pad left output to (H, W*Cout), fuse the add,
    #      and write the whole lane-dense tile with one store ---------------
    lpad = _pad2d(lout, pad_t, H - OH - pad_t,
                  pad_l * Cout, (W - OW - pad_l) * Cout)
    o_ref[...] = rout + lpad


def replk_block_forward(x_nchw, params, *, kernel_size=13, eps=1e-5):
    """RepLK_Block.forward (training-mode BatchNorm, stride=1) via Pallas."""
    N, Cin, H, W = x_nchw.shape
    K = kernel_size
    Cout = params["bbk"].shape[0]
    OH, OW = H - K + 1, W - K + 1
    f32 = jnp.float32

    x_nhwc = jnp.transpose(x_nchw, (0, 2, 3, 1)).astype(f32)
    x2 = x_nhwc.reshape(N, H, W * Cin)                        # lane-dense input slab

    # training-mode BatchNorm statistics (over N, H, W)
    mean = jnp.mean(x_nhwc, axis=(0, 1, 2))
    var = jnp.var(x_nhwc, axis=(0, 1, 2))      # biased, like torch BN training path
    inv = 1.0 / jnp.sqrt(var + eps)
    s1 = params["gamma1"] * inv
    t1 = params["beta1"] - mean * s1
    s2 = params["gamma2"] * inv
    t2 = params["beta2"] - mean * s2

    # ---- fold BN affines into the conv weights (one-time host work) --------
    wbk_eff = params["wbk"] * s1[None, None, :, None]          # (K,K,Cin,Cout)
    bbk_eff = params["bbk"] + jnp.einsum("c,hwco->o", t1, params["wbk"])
    w1_eff = s2[:, None] * params["w1"]                        # (Cin, Cin)
    b1_eff = params["b1"] + t2 @ params["w1"]

    # ---- build band (Toeplitz) weight matrices for the row-wide matmuls ----
    # 13x13 conv: (K, W*Cin, OW*Cout)
    tbk = jnp.zeros((K, W * Cin, OW * Cout), f32)
    wbk_rows = wbk_eff.reshape(K, K * Cin, Cout)
    for ow in range(OW):
        tbk = tbk.at[:, ow * Cin:(ow + K) * Cin,
                     ow * Cout:(ow + 1) * Cout].set(wbk_rows)

    # 3x3 conv (input already zero-padded by 1): (3, (W+2)*Cin, W*Cout)
    t3 = jnp.zeros((3, (W + 2) * Cin, W * Cout), f32)
    w2_rows = params["w2"].reshape(3, 3 * Cin, Cout)
    for ow in range(W):
        t3 = t3.at[:, ow * Cin:(ow + 3) * Cin,
                   ow * Cout:(ow + 1) * Cout].set(w2_rows)

    # 1x1 conv as block-diagonal matmul on the (rows, W*Cin) layout
    w1b = jnp.kron(jnp.eye(W, dtype=f32), w1_eff)              # (W*Cin, W*Cin)

    bbk_t = jnp.tile(bbk_eff, OW).reshape(1, OW * Cout)
    b1_t = jnp.tile(b1_eff, W).reshape(1, W * Cin)
    b2_t = jnp.tile(params["b2"], W).reshape(1, W * Cout)

    # reparameter() padding offsets (mirrors the PyTorch logic)
    p = (H - OH) // 2
    if OH + 2 * p < H:
        pad_t, pad_l = p + 1, p
    else:
        pad_t, pad_l = p, p

    kernel = functools.partial(_replk_kernel, K=K, H=H, W=W, OH=OH, OW=OW,
                               Cin=Cin, Cout=Cout, pad_t=pad_t, pad_l=pad_l)

    out2 = pl.pallas_call(
        kernel,
        out_shape=jax.ShapeDtypeStruct((N, H, W * Cout), f32),
        grid=(N,),
        in_specs=[
            pl.BlockSpec((None, H, W * Cin), lambda n: (n, 0, 0)),
            pl.BlockSpec((K, W * Cin, OW * Cout), lambda n: (0, 0, 0)),
            pl.BlockSpec((1, OW * Cout), lambda n: (0, 0)),
            pl.BlockSpec((W * Cin, W * Cin), lambda n: (0, 0)),
            pl.BlockSpec((1, W * Cin), lambda n: (0, 0)),
            pl.BlockSpec((3, (W + 2) * Cin, W * Cout), lambda n: (0, 0, 0)),
            pl.BlockSpec((1, W * Cout), lambda n: (0, 0)),
        ],
        out_specs=pl.BlockSpec((None, H, W * Cout), lambda n: (n, 0, 0)),
        compiler_params=pltpu.CompilerParams(dimension_semantics=("parallel",)),
    )(x2, tbk, bbk_t, w1b, b1_t, t3, b2_t)

    out_nhwc = out2.reshape(N, H, W, Cout)
    return jnp.transpose(out_nhwc, (0, 3, 1, 2))               # back to NCHW


def _reference_forward(x, params, eps=1e-5):
    """Pure-JAX (XLA) reference of the PyTorch forward, for verification."""
    hp = lax.Precision.HIGHEST
    dn = ("NCHW", "OIHW", "NCHW")

    def bn(v, gamma, beta):
        m = v.mean(axis=(0, 2, 3), keepdims=True)
        s = v.var(axis=(0, 2, 3), keepdims=True)
        return (v - m) / jnp.sqrt(s + eps) * gamma[None, :, None, None] \
            + beta[None, :, None, None]

    xb1 = bn(x, params["gamma1"], params["beta1"])
    wbk = jnp.transpose(params["wbk"], (3, 2, 0, 1))
    lout = lax.conv_general_dilated(xb1, wbk, (1, 1), "VALID",
                                    dimension_numbers=dn, precision=hp)
    lout = _elu(lout + params["bbk"][None, :, None, None])

    xb2 = bn(x, params["gamma2"], params["beta2"])
    w1 = jnp.transpose(params["w1"], (1, 0))[:, :, None, None]
    r1 = lax.conv_general_dilated(xb2, w1, (1, 1), "VALID",
                                  dimension_numbers=dn, precision=hp)
    r1 = r1 + params["b1"][None, :, None, None]
    w2 = jnp.transpose(params["w2"], (3, 2, 0, 1))
    r2 = lax.conv_general_dilated(r1, w2, (1, 1), ((1, 1), (1, 1)),
                                  dimension_numbers=dn, precision=hp)
    rout = _elu(r2 + params["b2"][None, :, None, None])

    p = (rout.shape[2] - lout.shape[2]) // 2
    if lout.shape[2] + 2 * p < rout.shape[2]:
        lpad = jnp.pad(lout, ((0, 0), (0, 0), (p + 1, p), (p, p + 1)))
    else:
        lpad = jnp.pad(lout, ((0, 0), (0, 0), (p, p), (p, p)))
    return lpad + rout


if __name__ == "__main__":
    N, Cin, Cout, H, W, K = 2, 4, 8, 16, 16, 13

    key = jax.random.PRNGKey(0)
    keys = jax.random.split(key, 8)
    params = {
        # BatchNorm2d defaults: gamma=1, beta=0 (training-mode batch stats used)
        "gamma1": jnp.ones((Cin,), jnp.float32),
        "beta1": jnp.zeros((Cin,), jnp.float32),
        "gamma2": jnp.ones((Cin,), jnp.float32),
        "beta2": jnp.zeros((Cin,), jnp.float32),
        # BKconv: Conv2d(Cin, Cout, 13)  (stored as kh, kw, cin, cout)
        "wbk": jax.random.normal(keys[0], (K, K, Cin, Cout), jnp.float32) * 0.05,
        "bbk": jax.random.normal(keys[1], (Cout,), jnp.float32) * 0.05,
        # conv1: Conv2d(Cin, Cin, 1)  (stored as cin, cout)
        "w1": jax.random.normal(keys[2], (Cin, Cin), jnp.float32) * 0.2,
        "b1": jax.random.normal(keys[3], (Cin,), jnp.float32) * 0.1,
        # conv2: Conv2d(Cin, Cout, 3, padding=1)  (stored as kh, kw, cin, cout)
        "w2": jax.random.normal(keys[4], (3, 3, Cin, Cout), jnp.float32) * 0.1,
        "b2": jax.random.normal(keys[5], (Cout,), jnp.float32) * 0.1,
    }
    x = jax.random.normal(keys[6], (N, Cin, H, W), jnp.float32)

    out = replk_block_forward(x, params, kernel_size=K)
    out = jax.block_until_ready(out)

    ref = _reference_forward(x, params)
    assert out.shape == ref.shape == (N, Cout, H, W)
    assert bool(jnp.allclose(out, ref, atol=5e-2, rtol=5e-2)), \
        "Pallas kernel disagrees with pure-JAX reference"

    print("KERNEL_OK")
</pallas_src>

<mosaic_0001>
module attributes {stable_mosaic.version = 11 : i64} {
  func.func @_replk_kernel(%arg0: i32, %arg1: memref<1x16x64xf32, #tpu.memory_space<vmem>>, %arg2: memref<13x64x32xf32, #tpu.memory_space<vmem>>, %arg3: memref<1x32xf32, #tpu.memory_space<vmem>>, %arg4: memref<64x64xf32, #tpu.memory_space<vmem>>, %arg5: memref<1x64xf32, #tpu.memory_space<vmem>>, %arg6: memref<3x72x128xf32, #tpu.memory_space<vmem>>, %arg7: memref<1x128xf32, #tpu.memory_space<vmem>>, %arg8: memref<1x16x128xf32, #tpu.memory_space<vmem>>) attributes {dimension_semantics = [#tpu.dimension_semantics<parallel>], iteration_bounds = array<i64: 2>, scalar_prefetch = 0 : i64, scratch_operands = 0 : i64, tpu.core_type = #tpu.core_type<tc>, window_params = [{transform_indices = @transform_0, window_bounds = array<i64: 1, 16, 64>}, {pipeline_mode = #tpu.pipeline_mode<synchronous>, transform_indices = @transform_1, window_bounds = array<i64: 13, 64, 32>}, {pipeline_mode = #tpu.pipeline_mode<synchronous>, transform_indices = @transform_2, window_bounds = array<i64: 1, 32>}, {pipeline_mode = #tpu.pipeline_mode<synchronous>, transform_indices = @transform_3, window_bounds = array<i64: 64, 64>}, {pipeline_mode = #tpu.pipeline_mode<synchronous>, transform_indices = @transform_4, window_bounds = array<i64: 1, 64>}, {pipeline_mode = #tpu.pipeline_mode<synchronous>, transform_indices = @transform_5, window_bounds = array<i64: 3, 72, 128>}, {pipeline_mode = #tpu.pipeline_mode<synchronous>, transform_indices = @transform_6, window_bounds = array<i64: 1, 128>}, {transform_indices = @transform_7, window_bounds = array<i64: 1, 16, 128>}]} {
    %c0 = arith.constant 0 : index
    %c0_0 = arith.constant 0 : index
    %c0_1 = arith.constant 0 : index
    %0 = vector.load %arg1[%c0, %c0_0, %c0_1] : memref<1x16x64xf32, #tpu.memory_space<vmem>>, vector<1x16x64xf32>
    %1 = vector.shape_cast %0 : vector<1x16x64xf32> to vector<16x64xf32>
    %cst = arith.constant 0.000000e+00 : f32
    %2 = vector.broadcast %cst : f32 to vector<4x32xf32>
    %3 = vector.extract_strided_slice %1 {offsets = [0, 0], sizes = [4, 64], strides = [1, 1]} : vector<16x64xf32> to vector<4x64xf32>
    %c0_2 = arith.constant 0 : index
    %c0_3 = arith.constant 0 : index
    %c0_4 = arith.constant 0 : index
    %4 = vector.load %arg2[%c0_2, %c0_3, %c0_4] : memref<13x64x32xf32, #tpu.memory_space<vmem>>, vector<1x64x32xf32>
    %5 = vector.shape_cast %4 : vector<1x64x32xf32> to vector<64x32xf32>
    %cst_5 = arith.constant dense<0.000000e+00> : vector<4x32xf32>
    %6 = tpu.matmul %3, %5, %cst_5 {dimension_numbers = #tpu.dot_dimension_numbers<[1], [0], [0], [1], [0, 0, 1, 1], [], []>} : vector<4x64xf32>, vector<64x32xf32>, vector<4x32xf32> -> vector<4x32xf32>
    %7 = arith.addf %2, %6 : vector<4x32xf32>
    %8 = vector.extract_strided_slice %1 {offsets = [1, 0], sizes = [4, 64], strides = [1, 1]} : vector<16x64xf32> to vector<4x64xf32>
    %c1 = arith.constant 1 : index
    %c0_6 = arith.constant 0 : index
    %c0_7 = arith.constant 0 : index
    %9 = vector.load %arg2[%c1, %c0_6, %c0_7] : memref<13x64x32xf32, #tpu.memory_space<vmem>>, vector<1x64x32xf32>
    %10 = vector.shape_cast %9 : vector<1x64x32xf32> to vector<64x32xf32>
    %cst_8 = arith.constant dense<0.000000e+00> : vector<4x32xf32>
    %11 = tpu.matmul %8, %10, %cst_8 {dimension_numbers = #tpu.dot_dimension_numbers<[1], [0], [0], [1], [0, 0, 1, 1], [], []>} : vector<4x64xf32>, vector<64x32xf32>, vector<4x32xf32> -> vector<4x32xf32>
    %12 = arith.addf %7, %11 : vector<4x32xf32>
    %13 = vector.extract_strided_slice %1 {offsets = [2, 0], sizes = [4, 64], strides = [1, 1]} : vector<16x64xf32> to vector<4x64xf32>
    %c2 = arith.constant 2 : index
    %c0_9 = arith.constant 0 : index
    %c0_10 = arith.constant 0 : index
    %14 = vector.load %arg2[%c2, %c0_9, %c0_10] : memref<13x64x32xf32, #tpu.memory_space<vmem>>, vector<1x64x32xf32>
    %15 = vector.shape_cast %14 : vector<1x64x32xf32> to vector<64x32xf32>
    %cst_11 = arith.constant dense<0.000000e+00> : vector<4x32xf32>
    %16 = tpu.matmul %13, %15, %cst_11 {dimension_numbers = #tpu.dot_dimension_numbers<[1], [0], [0], [1], [0, 0, 1, 1], [], []>} : vector<4x64xf32>, vector<64x32xf32>, vector<4x32xf32> -> vector<4x32xf32>
    %17 = arith.addf %12, %16 : vector<4x32xf32>
    %18 = vector.extract_strided_slice %1 {offsets = [3, 0], sizes = [4, 64], strides = [1, 1]} : vector<16x64xf32> to vector<4x64xf32>
    %c3 = arith.constant 3 : index
    %c0_12 = arith.constant 0 : index
    %c0_13 = arith.constant 0 : index
    %19 = vector.load %arg2[%c3, %c0_12, %c0_13] : memref<13x64x32xf32, #tpu.memory_space<vmem>>, vector<1x64x32xf32>
    %20 = vector.shape_cast %19 : vector<1x64x32xf32> to vector<64x32xf32>
    %cst_14 = arith.constant dense<0.000000e+00> : vector<4x32xf32>
    %21 = tpu.matmul %18, %20, %cst_14 {dimension_numbers = #tpu.dot_dimension_numbers<[1], [0], [0], [1], [0, 0, 1, 1], [], []>} : vector<4x64xf32>, vector<64x32xf32>, vector<4x32xf32> -> vector<4x32xf32>
    %22 = arith.addf %17, %21 : vector<4x32xf32>
    %23 = vector.extract_strided_slice %1 {offsets = [4, 0], sizes = [4, 64], strides = [1, 1]} : vector<16x64xf32> to vector<4x64xf32>
    %c4 = arith.constant 4 : index
    %c0_15 = arith.constant 0 : index
    %c0_16 = arith.constant 0 : index
    %24 = vector.load %arg2[%c4, %c0_15, %c0_16] : memref<13x64x32xf32, #tpu.memory_space<vmem>>, vector<1x64x32xf32>
    %25 = vector.shape_cast %24 : vector<1x64x32xf32> to vector<64x32xf32>
    %cst_17 = arith.constant dense<0.000000e+00> : vector<4x32xf32>
    %26 = tpu.matmul %23, %25, %cst_17 {dimension_numbers = #tpu.dot_dimension_numbers<[1], [0], [0], [1], [0, 0, 1, 1], [], []>} : vector<4x64xf32>, vector<64x32xf32>, vector<4x32xf32> -> vector<4x32xf32>
    %27 = arith.addf %22, %26 : vector<4x32xf32>
    %28 = vector.extract_strided_slice %1 {offsets = [5, 0], sizes = [4, 64], strides = [1, 1]} : vector<16x64xf32> to vector<4x64xf32>
    %c5 = arith.constant 5 : index
    %c0_18 = arith.constant 0 : index
    %c0_19 = arith.constant 0 : index
    %29 = vector.load %arg2[%c5, %c0_18, %c0_19] : memref<13x64x32xf32, #tpu.memory_space<vmem>>, vector<1x64x32xf32>
    %30 = vector.shape_cast %29 : vector<1x64x32xf32> to vector<64x32xf32>
    %cst_20 = arith.constant dense<0.000000e+00> : vector<4x32xf32>
    %31 = tpu.matmul %28, %30, %cst_20 {dimension_numbers = #tpu.dot_dimension_numbers<[1], [0], [0], [1], [0, 0, 1, 1], [], []>} : vector<4x64xf32>, vector<64x32xf32>, vector<4x32xf32> -> vector<4x32xf32>
    %32 = arith.addf %27, %31 : vector<4x32xf32>
    %33 = vector.extract_strided_slice %1 {offsets = [6, 0], sizes = [4, 64], strides = [1, 1]} : vector<16x64xf32> to vector<4x64xf32>
    %c6 = arith.constant 6 : index
    %c0_21 = arith.constant 0 : index
    %c0_22 = arith.constant 0 : index
    %34 = vector.load %arg2[%c6, %c0_21, %c0_22] : memref<13x64x32xf32, #tpu.memory_space<vmem>>, vector<1x64x32xf32>
    %35 = vector.shape_cast %34 : vector<1x64x32xf32> to vector<64x32xf32>
    %cst_23 = arith.constant dense<0.000000e+00> : vector<4x32xf32>
    %36 = tpu.matmul %33, %35, %cst_23 {dimension_numbers = #tpu.dot_dimension_numbers<[1], [0], [0], [1], [0, 0, 1, 1], [], []>} : vector<4x64xf32>, vector<64x32xf32>, vector<4x32xf32> -> vector<4x32xf32>
    %37 = arith.addf %32, %36 : vector<4x32xf32>
    %38 = vector.extract_strided_slice %1 {offsets = [7, 0], sizes = [4, 64], strides = [1, 1]} : vector<16x64xf32> to vector<4x64xf32>
    %c7 = arith.constant 7 : index
    %c0_24 = arith.constant 0 : index
    %c0_25 = arith.constant 0 : index
    %39 = vector.load %arg2[%c7, %c0_24, %c0_25] : memref<13x64x32xf32, #tpu.memory_space<vmem>>, vector<1x64x32xf32>
    %40 = vector.shape_cast %39 : vector<1x64x32xf32> to vector<64x32xf32>
    %cst_26 = arith.constant dense<0.000000e+00> : vector<4x32xf32>
    %41 = tpu.matmul %38, %40, %cst_26 {dimension_numbers = #tpu.dot_dimension_numbers<[1], [0], [0], [1], [0, 0, 1, 1], [], []>} : vector<4x64xf32>, vector<64x32xf32>, vector<4x32xf32> -> vector<4x32xf32>
    %42 = arith.addf %37, %41 : vector<4x32xf32>
    %43 = vector.extract_strided_slice %1 {offsets = [8, 0], sizes = [4, 64], strides = [1, 1]} : vector<16x64xf32> to vector<4x64xf32>
    %c8 = arith.constant 8 : index
    %c0_27 = arith.constant 0 : index
    %c0_28 = arith.constant 0 : index
    %44 = vector.load %arg2[%c8, %c0_27, %c0_28] : memref<13x64x32xf32, #tpu.memory_space<vmem>>, vector<1x64x32xf32>
    %45 = vector.shape_cast %44 : vector<1x64x32xf32> to vector<64x32xf32>
    %cst_29 = arith.constant dense<0.000000e+00> : vector<4x32xf32>
    %46 = tpu.matmul %43, %45, %cst_29 {dimension_numbers = #tpu.dot_dimension_numbers<[1], [0], [0], [1], [0, 0, 1, 1], [], []>} : vector<4x64xf32>, vector<64x32xf32>, vector<4x32xf32> -> vector<4x32xf32>
    %47 = arith.addf %42, %46 : vector<4x32xf32>
    %48 = vector.extract_strided_slice %1 {offsets = [9, 0], sizes = [4, 64], strides = [1, 1]} : vector<16x64xf32> to vector<4x64xf32>
    %c9 = arith.constant 9 : index
    %c0_30 = arith.constant 0 : index
    %c0_31 = arith.constant 0 : index
    %49 = vector.load %arg2[%c9, %c0_30, %c0_31] : memref<13x64x32xf32, #tpu.memory_space<vmem>>, vector<1x64x32xf32>
    %50 = vector.shape_cast %49 : vector<1x64x32xf32> to vector<64x32xf32>
    %cst_32 = arith.constant dense<0.000000e+00> : vector<4x32xf32>
    %51 = tpu.matmul %48, %50, %cst_32 {dimension_numbers = #tpu.dot_dimension_numbers<[1], [0], [0], [1], [0, 0, 1, 1], [], []>} : vector<4x64xf32>, vector<64x32xf32>, vector<4x32xf32> -> vector<4x32xf32>
    %52 = arith.addf %47, %51 : vector<4x32xf32>
    %53 = vector.extract_strided_slice %1 {offsets = [10, 0], sizes = [4, 64], strides = [1, 1]} : vector<16x64xf32> to vector<4x64xf32>
    %c10 = arith.constant 10 : index
    %c0_33 = arith.constant 0 : index
    %c0_34 = arith.constant 0 : index
    %54 = vector.load %arg2[%c10, %c0_33, %c0_34] : memref<13x64x32xf32, #tpu.memory_space<vmem>>, vector<1x64x32xf32>
    %55 = vector.shape_cast %54 : vector<1x64x32xf32> to vector<64x32xf32>
    %cst_35 = arith.constant dense<0.000000e+00> : vector<4x32xf32>
    %56 = tpu.matmul %53, %55, %cst_35 {dimension_numbers = #tpu.dot_dimension_numbers<[1], [0], [0], [1], [0, 0, 1, 1], [], []>} : vector<4x64xf32>, vector<64x32xf32>, vector<4x32xf32> -> vector<4x32xf32>
    %57 = arith.addf %52, %56 : vector<4x32xf32>
    %58 = vector.extract_strided_slice %1 {offsets = [11, 0], sizes = [4, 64], strides = [1, 1]} : vector<16x64xf32> to vector<4x64xf32>
    %c11 = arith.constant 11 : index
    %c0_36 = arith.constant 0 : index
    %c0_37 = arith.constant 0 : index
    %59 = vector.load %arg2[%c11, %c0_36, %c0_37] : memref<13x64x32xf32, #tpu.memory_space<vmem>>, vector<1x64x32xf32>
    %60 = vector.shape_cast %59 : vector<1x64x32xf32> to vector<64x32xf32>
    %cst_38 = arith.constant dense<0.000000e+00> : vector<4x32xf32>
    %61 = tpu.matmul %58, %60, %cst_38 {dimension_numbers = #tpu.dot_dimension_numbers<[1], [0], [0], [1], [0, 0, 1, 1], [], []>} : vector<4x64xf32>, vector<64x32xf32>, vector<4x32xf32> -> vector<4x32xf32>
    %62 = arith.addf %57, %61 : vector<4x32xf32>
    %63 = vector.extract_strided_slice %1 {offsets = [12, 0], sizes = [4, 64], strides = [1, 1]} : vector<16x64xf32> to vector<4x64xf32>
    %c12 = arith.constant 12 : index
    %c0_39 = arith.constant 0 : index
    %c0_40 = arith.constant 0 : index
    %64 = vector.load %arg2[%c12, %c0_39, %c0_40] : memref<13x64x32xf32, #tpu.memory_space<vmem>>, vector<1x64x32xf32>
    %65 = vector.shape_cast %64 : vector<1x64x32xf32> to vector<64x32xf32>
    %cst_41 = arith.constant dense<0.000000e+00> : vector<4x32xf32>
    %66 = tpu.matmul %63, %65, %cst_41 {dimension_numbers = #tpu.dot_dimension_numbers<[1], [0], [0], [1], [0, 0, 1, 1], [], []>} : vector<4x64xf32>, vector<64x32xf32>, vector<4x32xf32> -> vector<4x32xf32>
    %67 = arith.addf %62, %66 : vector<4x32xf32>
    %c0_42 = arith.constant 0 : index
    %c0_43 = arith.constant 0 : index
    %68 = vector.load %arg3[%c0_42, %c0_43] : memref<1x32xf32, #tpu.memory_space<vmem>>, vector<1x32xf32>
    %69 = vector.broadcast %68 : vector<1x32xf32> to vector<4x32xf32>
    %70 = arith.addf %67, %69 : vector<4x32xf32>
    %cst_44 = arith.constant 0.000000e+00 : f32
    %71 = vector.broadcast %cst_44 : f32 to vector<4x32xf32>
    %72 = arith.cmpf ogt, %70, %71 : vector<4x32xf32>
    %73 = math.exp %70 : vector<4x32xf32>
    %cst_45 = arith.constant 1.000000e+00 : f32
    %74 = vector.broadcast %cst_45 : f32 to vector<4x32xf32>
    %75 = arith.subf %73, %74 : vector<4x32xf32>
    %76 = arith.select %72, %70, %75 : vector<4x32xi1>, vector<4x32xf32>
    %c0_46 = arith.constant 0 : index
    %c0_47 = arith.constant 0 : index
    %77 = vector.load %arg4[%c0_46, %c0_47] : memref<64x64xf32, #tpu.memory_space<vmem>>, vector<64x64xf32>
    %cst_48 = arith.constant dense<0.000000e+00> : vector<16x64xf32>
    %78 = tpu.matmul %1, %77, %cst_48 {dimension_numbers = #tpu.dot_dimension_numbers<[1], [0], [0], [1], [0, 0, 1, 1], [], []>} : vector<16x64xf32>, vector<64x64xf32>, vector<16x64xf32> -> vector<16x64xf32>
    %c0_49 = arith.constant 0 : index
    %c0_50 = arith.constant 0 : index
    %79 = vector.load %arg5[%c0_49, %c0_50] : memref<1x64xf32, #tpu.memory_space<vmem>>, vector<1x64xf32>
    %80 = vector.broadcast %79 : vector<1x64xf32> to vector<16x64xf32>
    %81 = arith.addf %78, %80 : vector<16x64xf32>
    %cst_51 = arith.constant 0.000000e+00 : f32
    %82 = vector.broadcast %cst_51 : f32 to vector<16x4xf32>
    %cst_52 = arith.constant 0.000000e+00 : f32
    %83 = vector.broadcast %cst_52 : f32 to vector<1x72xf32>
    %84 = tpu.concatenate %82, %81, %82 in 1 : vector<16x4xf32>, vector<16x64xf32>, vector<16x4xf32> -> vector<16x72xf32>
    %85 = tpu.concatenate %83, %84, %83 in 0 : vector<1x72xf32>, vector<16x72xf32>, vector<1x72xf32> -> vector<18x72xf32>
    %cst_53 = arith.constant 0.000000e+00 : f32
    %86 = vector.broadcast %cst_53 : f32 to vector<16x128xf32>
    %87 = vector.extract_strided_slice %85 {offsets = [0, 0], sizes = [16, 72], strides = [1, 1]} : vector<18x72xf32> to vector<16x72xf32>
    %c0_54 = arith.constant 0 : index
    %c0_55 = arith.constant 0 : index
    %c0_56 = arith.constant 0 : index
    %88 = vector.load %arg6[%c0_54, %c0_55, %c0_56] : memref<3x72x128xf32, #tpu.memory_space<vmem>>, vector<1x72x128xf32>
    %89 = vector.shape_cast %88 : vector<1x72x128xf32> to vector<72x128xf32>
    %cst_57 = arith.constant dense<0.000000e+00> : vector<16x128xf32>
    %90 = tpu.matmul %87, %89, %cst_57 {dimension_numbers = #tpu.dot_dimension_numbers<[1], [0], [0], [1], [0, 0, 1, 1], [], []>} : vector<16x72xf32>, vector<72x128xf32>, vector<16x128xf32> -> vector<16x128xf32>
    %91 = arith.addf %86, %90 : vector<16x128xf32>
    %92 = vector.extract_strided_slice %85 {offsets = [1, 0], sizes = [16, 72], strides = [1, 1]} : vector<18x72xf32> to vector<16x72xf32>
    %c1_58 = arith.constant 1 : index
    %c0_59 = arith.constant 0 : index
    %c0_60 = arith.constant 0 : index
    %93 = vector.load %arg6[%c1_58, %c0_59, %c0_60] : memref<3x72x128xf32, #tpu.memory_space<vmem>>, vector<1x72x128xf32>
    %94 = vector.shape_cast %93 : vector<1x72x128xf32> to vector<72x128xf32>
    %cst_61 = arith.constant dense<0.000000e+00> : vector<16x128xf32>
    %95 = tpu.matmul %92, %94, %cst_61 {dimension_numbers = #tpu.dot_dimension_numbers<[1], [0], [0], [1], [0, 0, 1, 1], [], []>} : vector<16x72xf32>, vector<72x128xf32>, vector<16x128xf32> -> vector<16x128xf32>
    %96 = arith.addf %91, %95 : vector<16x128xf32>
    %97 = vector.extract_strided_slice %85 {offsets = [2, 0], sizes = [16, 72], strides = [1, 1]} : vector<18x72xf32> to vector<16x72xf32>
    %c2_62 = arith.constant 2 : index
    %c0_63 = arith.constant 0 : index
    %c0_64 = arith.constant 0 : index
    %98 = vector.load %arg6[%c2_62, %c0_63, %c0_64] : memref<3x72x128xf32, #tpu.memory_space<vmem>>, vector<1x72x128xf32>
    %99 = vector.shape_cast %98 : vector<1x72x128xf32> to vector<72x128xf32>
    %cst_65 = arith.constant dense<0.000000e+00> : vector<16x128xf32>
    %100 = tpu.matmul %97, %99, %cst_65 {dimension_numbers = #tpu.dot_dimension_numbers<[1], [0], [0], [1], [0, 0, 1, 1], [], []>} : vector<16x72xf32>, vector<72x128xf32>, vector<16x128xf32> -> vector<16x128xf32>
    %101 = arith.addf %96, %100 : vector<16x128xf32>
    %c0_66 = arith.constant 0 : index
    %c0_67 = arith.constant 0 : index
    %102 = vector.load %arg7[%c0_66, %c0_67] : memref<1x128xf32, #tpu.memory_space<vmem>>, vector<1x128xf32>
    %103 = vector.broadcast %102 : vector<1x128xf32> to vector<16x128xf32>
    %104 = arith.addf %101, %103 : vector<16x128xf32>
    %cst_68 = arith.constant 0.000000e+00 : f32
    %105 = vector.broadcast %cst_68 : f32 to vector<16x128xf32>
    %106 = arith.cmpf ogt, %104, %105 : vector<16x128xf32>
    %107 = math.exp %104 : vector<16x128xf32>
    %cst_69 = arith.constant 1.000000e+00 : f32
    %108 = vector.broadcast %cst_69 : f32 to vector<16x128xf32>
    %109 = arith.subf %107, %108 : vector<16x128xf32>
    %110 = arith.select %106, %104, %109 : vector<16x128xi1>, vector<16x128xf32>
    %cst_70 = arith.constant 0.000000e+00 : f32
    %111 = vector.broadcast %cst_70 : f32 to vector<4x48xf32>
    %cst_71 = arith.constant 0.000000e+00 : f32
    %112 = vector.broadcast %cst_71 : f32 to vector<4x48xf32>
    %113 = tpu.concatenate %111, %76, %112 in 1 : vector<4x48xf32>, vector<4x32xf32>, vector<4x48xf32> -> vector<4x128xf32>
    %cst_72 = arith.constant 0.000000e+00 : f32
    %114 = vector.broadcast %cst_72 : f32 to vector<6x128xf32>
    %cst_73 = arith.constant 0.000000e+00 : f32
    %115 = vector.broadcast %cst_73 : f32 to vector<6x128xf32>
    %116 = tpu.concatenate %114, %113, %115 in 0 : vector<6x128xf32>, vector<4x128xf32>, vector<6x128xf32> -> vector<16x128xf32>
    %117 = arith.addf %110, %116 : vector<16x128xf32>
    %c0_74 = arith.constant 0 : index
    %c0_75 = arith.constant 0 : index
    %c0_76 = arith.constant 0 : index
    %118 = vector.load %arg8[%c0_74, %c0_75, %c0_76] : memref<1x16x128xf32, #tpu.memory_space<vmem>>, vector<1x16x128xf32>
    %119 = vector.shape_cast %118 : vector<1x16x128xf32> to vector<16x128xf32>
    %120 = vector.shape_cast %117 : vector<16x128xf32> to vector<1x16x128xf32>
    tpu.vector_store %arg8[%c0_74, %c0_75, %c0_76], %120 {strides = array<i32>} : memref<1x16x128xf32, #tpu.memory_space<vmem>>, vector<1x16x128xf32>,
    return
  }
  func.func @transform_0(%arg0: i32) -> (i32, i32, i32) {
    %c0_i32 = arith.constant 0 : i32
    %c0_i32_0 = arith.constant 0 : i32
    %c0_i32_1 = arith.constant 0 : i32
    return %arg0, %c0_i32, %c0_i32_0 : i32, i32, i32
  }
  func.func @transform_1(%arg0: i32) -> (i32, i32, i32) {
    %c0_i32 = arith.constant 0 : i32
    %c0_i32_0 = arith.constant 0 : i32
    %c0_i32_1 = arith.constant 0 : i32
    %c0_i32_2 = arith.constant 0 : i32
    return %c0_i32, %c0_i32_0, %c0_i32_1 : i32, i32, i32
  }
  func.func @transform_2(%arg0: i32) -> (i32, i32) {
    %c0_i32 = arith.constant 0 : i32
    %c0_i32_0 = arith.constant 0 : i32
    %c0_i32_1 = arith.constant 0 : i32
    return %c0_i32, %c0_i32_0 : i32, i32
  }
  func.func @transform_3(%arg0: i32) -> (i32, i32) {
    %c0_i32 = arith.constant 0 : i32
    %c0_i32_0 = arith.constant 0 : i32
    %c0_i32_1 = arith.constant 0 : i32
    return %c0_i32, %c0_i32_0 : i32, i32
  }
  func.func @transform_4(%arg0: i32) -> (i32, i32) {
    %c0_i32 = arith.constant 0 : i32
    %c0_i32_0 = arith.constant 0 : i32
    %c0_i32_1 = arith.constant 0 : i32
    return %c0_i32, %c0_i32_0 : i32, i32
  }
  func.func @transform_5(%arg0: i32) -> (i32, i32, i32) {
    %c0_i32 = arith.constant 0 : i32
    %c0_i32_0 = arith.constant 0 : i32
    %c0_i32_1 = arith.constant 0 : i32
    %c0_i32_2 = arith.constant 0 : i32
    return %c0_i32, %c0_i32_0, %c0_i32_1 : i32, i32, i32
  }
  func.func @transform_6(%arg0: i32) -> (i32, i32) {
    %c0_i32 = arith.constant 0 : i32
    %c0_i32_0 = arith.constant 0 : i32
    %c0_i32_1 = arith.constant 0 : i32
    return %c0_i32, %c0_i32_0 : i32, i32
  }
  func.func @transform_7(%arg0: i32) -> (i32, i32, i32) {
    %c0_i32 = arith.constant 0 : i32
    %c0_i32_0 = arith.constant 0 : i32
    %c0_i32_1 = arith.constant 0 : i32
    return %arg0, %c0_i32, %c0_i32_0 : i32, i32, i32
  }
}

</mosaic_0001>

<llo_original>
// kernel: tpu_custom_call.1
$region0: #{tpu_custom_call.1}
  #allocation0 [shape = 'u32[]', space=smem, size = 0x4, offset = 0x4, fixed_abs, tag = 'smem constant byte address 0x4 - core index']
  #allocation1 [shape = 'u32[144,128]{1,0:T(1,128)}', space=vmem, size = 0x12000, scoped, tag = 'internal scratch']
  %s0 = inlined_call_operand.vmem [shape: f32[2,16,64], index: 0, kind: input, shape index: {}]
  %s1 = inlined_call_operand.vmem [shape: f32[13,64,32], index: 1, kind: input, shape index: {}]
  %s2 = inlined_call_operand.vmem [shape: f32[1,32], index: 2, kind: input, shape index: {}]
  %s3 = inlined_call_operand.vmem [shape: f32[64,64], index: 3, kind: input, shape index: {}]
  %s4 = inlined_call_operand.vmem [shape: f32[1,64], index: 4, kind: input, shape index: {}]
  %s5 = inlined_call_operand.vmem [shape: f32[3,72,128], index: 5, kind: input, shape index: {}]
  %s6 = inlined_call_operand.vmem [shape: f32[1,128], index: 6, kind: input, shape index: {}]
  %s7 = inlined_call_operand.hbm [shape: f32[2,16,128], index: 7, kind: output, shape index: {}]
  %s8 = sld [smem:[#allocation0]]
  $region61: #{tpu_custom_call.1} parent=0
    _
  %s10 = ssub.s32 1, %s8
  %s11 = scalar_select 0, %s10, %s8
  $region1: #{tpu_custom_call.1} parent=0
    #allocation2 [shape = 'u8[16384]{0}', space=vmem, size = 0x4000, scoped, tag = 'output window, operand 0']
    #allocation3 [shape = 's32[2]{0}', space=sflag, size = 0x8, scoped, tag = 'scoped memory for tpu_custom_call.1']
    %12 = vsyncpa [#allocation3], 0
    %s13 = scalar_lea.sflag [#allocation3], 1
    %14 = vsyncpa %s13, 0
    loop: start=0, step=1, limit=4
    $region2: #{tpu_custom_call.1} parent=1 // loop_pre_header
      _
    $region3: #{tpu_custom_call.1} parent=1 // loop_header
      %s16 = sphi 0, %s20
      %p17 = scmp.ge.s32.totalorder %s16, 4
      %s26 = sphi 0, %s28
      %s29 = sphi 0, %s26
      %s30 = sphi 0, %s29
      %s46 = sphi 0, %s30
      %s50 = sphi 0, %s50
      %s52 = sphi 0, %s50
      %s53 = sphi 0, %s52
      %s67 = sphi 0, %s53
      %s71 = sphi 0, %s71
      %s73 = sphi 0, %s71
      %s74 = sphi 0, %s73
      %s88 = sphi 0, %s74
      %s92 = sphi 0, %s92
      %s94 = sphi 0, %s92
      %s95 = sphi 0, %s94
      %s109 = sphi 0, %s95
      %s113 = sphi 0, %s113
      %s115 = sphi 0, %s113
      %s116 = sphi 0, %s115
      %s130 = sphi 0, %s116
      %s134 = sphi 0, %s134
      %s136 = sphi 0, %s134
      %s137 = sphi 0, %s136
      %s151 = sphi 0, %s137
      %s155 = sphi 0, %s155
      %s157 = sphi 0, %s155
      %s158 = sphi 0, %s157
      %s172 = sphi 0, %s158
      %s178 = sphi 0, %s180
      %s181 = sphi 0, %s178
      %s182 = sphi 0, %s181
      %s198 = sphi 0, %s182
    $region4: #{tpu_custom_call.1} parent=1 // loop_header_branch
      %19 = sbr.rel (%p17) target = $region8
    $region5: #{tpu_custom_call.1} parent=1 // loop_body
      %s21 = ssub.s32 %s16, 1
      %s22 = ssub.s32 %s16, 2
      %s23 = sadd.s32 %s16, 1
      %s24 = ssub.s32 %s16, %s23
      %p25 = scmp.eq.s32.totalorder %s24, 0
      %s27 = sadd.s32 %s26, 1
      %s28 = scalar_select %p25, %s26, %s27
      %p31 = pneg %p25
      %p32 = scmp.eq.s32.totalorder %s16, 1
      %p33 = por %p31, %p32
      %p34 = scmp.ne.s32.totalorder %s26, %s29
      %p35 = scmp.eq.s32.totalorder %s16, 0
      %p36 = por %p34, %p35
      %p37 = scmp.ne.s32.totalorder %s26, %s29
      %p38 = scmp.eq.s32.totalorder %s21, 1
      %p39 = por %p37, %p38
      %p40 = scmp.ne.s32.totalorder %s29, %s30
      %p41 = scmp.eq.s32.totalorder %s21, 0
      %p42 = por %p40, %p41
      %p43 = scmp.ne.s32.totalorder %s29, %s30
      %p44 = scmp.eq.s32.totalorder %s22, 1
      %p45 = por %p43, %p44
      %p47 = scmp.ne.s32.totalorder %s30, %s46
      %p48 = scmp.eq.s32.totalorder %s22, 0
      %p49 = por %p47, %p48
      %s51 = sadd.s32 %s50, 1
      %p54 = scmp.eq.s32.totalorder %s16, 1
      %p55 = scmp.ne.s32.totalorder %s50, %s52
      %p56 = scmp.eq.s32.totalorder %s16, 0
      %p57 = por %p55, %p56
      %p58 = scmp.ne.s32.totalorder %s50, %s52
      %p59 = scmp.eq.s32.totalorder %s21, 1
      %p60 = por %p58, %p59
      %p61 = scmp.ne.s32.totalorder %s52, %s53
      %p62 = scmp.eq.s32.totalorder %s21, 0
      %p63 = por %p61, %p62
      %p64 = scmp.ne.s32.totalorder %s52, %s53
      %p65 = scmp.eq.s32.totalorder %s22, 1
      %p66 = por %p64, %p65
      %p68 = scmp.ne.s32.totalorder %s53, %s67
      %p69 = scmp.eq.s32.totalorder %s22, 0
      %p70 = por %p68, %p69
      %s72 = sadd.s32 %s71, 1
      %p75 = scmp.eq.s32.totalorder %s16, 1
      %p76 = scmp.ne.s32.totalorder %s71, %s73
      %p77 = scmp.eq.s32.totalorder %s16, 0
      %p78 = por %p76, %p77
      %p79 = scmp.ne.s32.totalorder %s71, %s73
      %p80 = scmp.eq.s32.totalorder %s21, 1
      %p81 = por %p79, %p80
      %p82 = scmp.ne.s32.totalorder %s73, %s74
      %p83 = scmp.eq.s32.totalorder %s21, 0
      %p84 = por %p82, %p83
      %p85 = scmp.ne.s32.totalorder %s73, %s74
      %p86 = scmp.eq.s32.totalorder %s22, 1
      %p87 = por %p85, %p86
      %p89 = scmp.ne.s32.totalorder %s74, %s88
      %p90 = scmp.eq.s32.totalorder %s22, 0
      %p91 = por %p89, %p90
      %s93 = sadd.s32 %s92, 1
      %p96 = scmp.eq.s32.totalorder %s16, 1
      %p97 = scmp.ne.s32.totalorder %s92, %s94
      %p98 = scmp.eq.s32.totalorder %s16, 0
      %p99 = por %p97, %p98
      %p100 = scmp.ne.s32.totalorder %s92, %s94
      %p101 = scmp.eq.s32.totalorder %s21, 1
      %p102 = por %p100, %p101
      %p103 = scmp.ne.s32.totalorder %s94, %s95
      %p104 = scmp.eq.s32.totalorder %s21, 0
      %p105 = por %p103, %p104
      %p106 = scmp.ne.s32.totalorder %s94, %s95
      %p107 = scmp.eq.s32.totalorder %s22, 1
      %p108 = por %p106, %p107
      %p110 = scmp.ne.s32.totalorder %s95, %s109
      %p111 = scmp.eq.s32.totalorder %s22, 0
      %p112 = por %p110, %p111
      %s114 = sadd.s32 %s113, 1
      %p117 = scmp.eq.s32.totalorder %s16, 1
      %p118 = scmp.ne.s32.totalorder %s113, %s115
      %p119 = scmp.eq.s32.totalorder %s16, 0
      %p120 = por %p118, %p119
      %p121 = scmp.ne.s32.totalorder %s113, %s115
      %p122 = scmp.eq.s32.totalorder %s21, 1
      %p123 = por %p121, %p122
      %p124 = scmp.ne.s32.totalorder %s115, %s116
      %p125 = scmp.eq.s32.totalorder %s21, 0
      %p126 = por %p124, %p125
      %p127 = scmp.ne.s32.totalorder %s115, %s116
      %p128 = scmp.eq.s32.totalorder %s22, 1
      %p129 = por %p127, %p128
      %p131 = scmp.ne.s32.totalorder %s116, %s130
      %p132 = scmp.eq.s32.totalorder %s22, 0
      %p133 = por %p131, %p132
      %s135 = sadd.s32 %s134, 1
      %p138 = scmp.eq.s32.totalorder %s16, 1
      %p139 = scmp.ne.s32.totalorder %s134, %s136
      %p140 = scmp.eq.s32.totalorder %s16, 0
      %p141 = por %p139, %p140
      %p142 = scmp.ne.s32.totalorder %s134, %s136
      %p143 = scmp.eq.s32.totalorder %s21, 1
      %p144 = por %p142, %p143
      %p145 = scmp.ne.s32.totalorder %s136, %s137
      %p146 = scmp.eq.s32.totalorder %s21, 0
      %p147 = por %p145, %p146
      %p148 = scmp.ne.s32.totalorder %s136, %s137
      %p149 = scmp.eq.s32.totalorder %s22, 1
      %p150 = por %p148, %p149
      %p152 = scmp.ne.s32.totalorder %s137, %s151
      %p153 = scmp.eq.s32.totalorder %s22, 0
      %p154 = por %p152, %p153
      %s156 = sadd.s32 %s155, 1
      %p159 = scmp.eq.s32.totalorder %s16, 1
      %p160 = scmp.ne.s32.totalorder %s155, %s157
      %p161 = scmp.eq.s32.totalorder %s16, 0
      %p162 = por %p160, %p161
      %p163 = scmp.ne.s32.totalorder %s155, %s157
      %p164 = scmp.eq.s32.totalorder %s21, 1
      %p165 = por %p163, %p164
      %p166 = scmp.ne.s32.totalorder %s157, %s158
      %p167 = scmp.eq.s32.totalorder %s21, 0
      %p168 = por %p166, %p167
      %p169 = scmp.ne.s32.totalorder %s157, %s158
      %p170 = scmp.eq.s32.totalorder %s22, 1
      %p171 = por %p169, %p170
      %p173 = scmp.ne.s32.totalorder %s158, %s172
      %p174 = scmp.eq.s32.totalorder %s22, 0
      %p175 = por %p173, %p174
      %s176 = ssub.s32 %s16, %s23
      %p177 = scmp.eq.s32.totalorder %s176, 0
      %s179 = sadd.s32 %s178, 1
      %s180 = scalar_select %p177, %s178, %s179
      %p183 = pneg %p177
      %p184 = scmp.eq.s32.totalorder %s16, 1
      %p185 = por %p183, %p184
      %p186 = scmp.ne.s32.totalorder %s178, %s181
      %p187 = scmp.eq.s32.totalorder %s16, 0
      %p188 = por %p186, %p187
      %p189 = scmp.ne.s32.totalorder %s178, %s181
      %p190 = scmp.eq.s32.totalorder %s21, 1
      %p191 = por %p189, %p190
      %p192 = scmp.ne.s32.totalorder %s181, %s182
      %p193 = scmp.eq.s32.totalorder %s21, 0
      %p194 = por %p192, %p193
      %p195 = scmp.ne.s32.totalorder %s181, %s182
      %p196 = scmp.eq.s32.totalorder %s22, 1
      %p197 = por %p195, %p196
      %p199 = scmp.ne.s32.totalorder %s182, %s198
      %p200 = scmp.eq.s32.totalorder %s22, 0
      %p201 = por %p199, %p200
      %p202 = scmp.le.s32.totalorder 1, %s16
      %p203 = scmp.lt.s32.totalorder %s16, 3
      %p204 = pnand %p202, %p203
      %p205 = pneg %p204
      // Predicated region
      $region9: #{tpu_custom_call.1} parent=5 // pred_check
        _
      $region10: #{tpu_custom_call.1} parent=5 // pred_check_branch
        %207 = sbr.rel (%p204) target = $region12
      $region11: #{tpu_custom_call.1} parent=5 // pred_region
        %s208 = ssub.s32 %s16, 1
        // Predicated region
        $region13: #{tpu_custom_call.1} parent=11 // pred_check
          %p209 = pneg %p63
        $region14: #{tpu_custom_call.1} parent=11 // pred_check_branch
          %211 = sbr.rel (%p209) target = $region16
        $region15: #{tpu_custom_call.1} parent=11 // pred_region
          _
        $region16: #{tpu_custom_call.1} parent=11 // pred_fallthru
          _
        // Predicated region
        $region17: #{tpu_custom_call.1} parent=11 // pred_check
          %p212 = pneg %p84
        $region18: #{tpu_custom_call.1} parent=11 // pred_check_branch
          %214 = sbr.rel (%p212) target = $region20
        $region19: #{tpu_custom_call.1} parent=11 // pred_region
          _
        $region20: #{tpu_custom_call.1} parent=11 // pred_fallthru
          _
        // Predicated region
        $region21: #{tpu_custom_call.1} parent=11 // pred_check
          %p215 = pneg %p105
        $region22: #{tpu_custom_call.1} parent=11 // pred_check_branch
          %217 = sbr.rel (%p215) target = $region24
        $region23: #{tpu_custom_call.1} parent=11 // pred_region
          _
        $region24: #{tpu_custom_call.1} parent=11 // pred_fallthru
          _
        // Predicated region
        $region25: #{tpu_custom_call.1} parent=11 // pred_check
          %p218 = pneg %p126
        $region26: #{tpu_custom_call.1} parent=11 // pred_check_branch
          %220 = sbr.rel (%p218) target = $region28
        $region27: #{tpu_custom_call.1} parent=11 // pred_region
          _
        $region28: #{tpu_custom_call.1} parent=11 // pred_fallthru
          _
        // Predicated region
        $region29: #{tpu_custom_call.1} parent=11 // pred_check
          %p221 = pneg %p147
        $region30: #{tpu_custom_call.1} parent=11 // pred_check_branch
          %223 = sbr.rel (%p221) target = $region32
        $region31: #{tpu_custom_call.1} parent=11 // pred_region
          _
        $region32: #{tpu_custom_call.1} parent=11 // pred_fallthru
          _
        // Predicated region
        $region33: #{tpu_custom_call.1} parent=11 // pred_check
          %p224 = pneg %p168
        $region34: #{tpu_custom_call.1} parent=11 // pred_check_branch
          %226 = sbr.rel (%p224) target = $region36
        $region35: #{tpu_custom_call.1} parent=11 // pred_region
          _
        $region36: #{tpu_custom_call.1} parent=11 // pred_fallthru
          _
      $region12: #{tpu_custom_call.1} parent=5 // pred_fallthru
        _
      %p227 = scmp.lt.s32.totalorder %s16, 2
      // Predicated region
      $region37: #{tpu_custom_call.1} parent=5 // pred_check
        %p228 = pneg %p227
      $region38: #{tpu_custom_call.1} parent=5 // pred_check_branch
        %230 = sbr.rel (%p228) target = $region40
      $region39: #{tpu_custom_call.1} parent=5 // pred_region
        // Predicated region
        $region41: #{tpu_custom_call.1} parent=39 // pred_check
          %p231 = pneg %p36
        $region42: #{tpu_custom_call.1} parent=39 // pred_check_branch
          %233 = sbr.rel (%p231) target = $region44
        $region43: #{tpu_custom_call.1} parent=39 // pred_region
          %p234 = scmp.lt.s32.totalorder %s16, 1
          %s235 = scalar_select %p234, %s16, 1
          %s236 = smul.addr %s235, 2
          %s237 = smul.addr %s236, 8
          %s238 = scalar_lea.vmem %s0, %s237
        $region44: #{tpu_custom_call.1} parent=39 // pred_fallthru
          _
      $region40: #{tpu_custom_call.1} parent=5 // pred_fallthru
        _
      %p239 = scmp.le.s32.totalorder 1, %s16
      %p240 = scmp.lt.s32.totalorder %s16, 3
      %p241 = pnand %p239, %p240
      %p242 = pneg %p241
      // Predicated region
      $region45: #{tpu_custom_call.1} parent=5 // pred_check
        _
      $region46: #{tpu_custom_call.1} parent=5 // pred_check_branch
        %244 = sbr.rel (%p241) target = $region48
      $region47: #{tpu_custom_call.1} parent=5 // pred_region
        %s245 = ssub.s32 %s16, 1
        %p246 = scmp.lt.s32.totalorder %s21, 1
        %s247 = scalar_select %p246, %s21, 1
        %s248 = smul.addr %s247, 2
        %s249 = smul.addr %s248, 8
        %s250 = scalar_lea.vmem %s0, %s249
        %p251 = pneg %p42
        %p252 = pneg %p39
        %p253 = pneg %p63
        %p254 = pneg %p60
        %p255 = pneg %p84
        %p256 = pneg %p81
        %p257 = pneg %p105
        %p258 = pneg %p102
        %p259 = pneg %p126
        %p260 = pneg %p123
        %p261 = pneg %p147
        %p262 = pneg %p144
        %p263 = pneg %p168
        %p264 = pneg %p165
        %p265 = pneg %p194
        %p266 = pneg %p191
        %s267 = sand.u32 %s181, 1
        %s268 = scalar_lea.sflag [#allocation3], %s267
        %s269 = sand.u32 %s181, 1
        %s270 = smul.addr %s269, 16
        %s271 = scalar_lea.vmem [#allocation2], %s270
        %p272 = scmp.lt.s32.totalorder %s21, 1
        %s273 = scalar_select %p272, %s21, 1
        %s274 = smul.addr %s273, 2
        %s275 = smul.addr %s274, 8
        %s276 = scalar_lea.vmem %s0, %s275
        %v277 = vld [vmem:[%s276] sm:$0xff]
        %v278 = vld [vmem:[%s276 + $0x8] sm:$0xff]
        %v279 = vld [vmem:[%s1] sm:$0xff]
        %v280 = vld [vmem:[%s1 + $0x8] sm:$0xff]
        %v281 = vld [vmem:[%s1 + $0x10] sm:$0xff]
        %v282 = vld [vmem:[%s1 + $0x18] sm:$0xff]
        %v283 = vld [vmem:[%s1 + $0x20] sm:$0xff]
        %v284 = vld [vmem:[%s1 + $0x28] sm:$0xff]
        %v285 = vld [vmem:[%s1 + $0x30] sm:$0xff]
        %v286 = vld [vmem:[%s1 + $0x38] sm:$0xff]
        %s287 = scalar_lea.vmem %s1, 64
        %v288 = vld [vmem:[%s287] sm:$0xff]
        %v289 = vld [vmem:[%s287 + $0x8] sm:$0xff]
        %v290 = vld [vmem:[%s287 + $0x10] sm:$0xff]
        %v291 = vld [vmem:[%s287 + $0x18] sm:$0xff]
        %v292 = vld [vmem:[%s287 + $0x20] sm:$0xff]
        %v293 = vld [vmem:[%s287 + $0x28] sm:$0xff]
        %v294 = vld [vmem:[%s287 + $0x30] sm:$0xff]
        %v295 = vld [vmem:[%s287 + $0x38] sm:$0xff]
        %v297 = vrot.slane %v277, 1
        %vm298 = vcmask 523264
        %v299 = vsel %vm298, %v297, 0
        %301 = vmatprep.subr.mxu0 0.0
        %302 = vmatpush1.msra.mxu0 %v288
        %303 = vmatprep.subr.mxu0 0.0
        %304 = vmatpush1.msra.mxu0 %v289
        %305 = vmatprep.subr.mxu0 0.0
        %306 = vmatpush1.msra.mxu0 %v290
        %307 = vmatprep.subr.mxu0 0.0
        %308 = vmatpush1.msra.mxu0 %v291
        %309 = vmatprep.subr.mxu0 0.0
        %310 = vmatpush1.msra.mxu0 %v292
        %311 = vmatprep.subr.mxu0 0.0
        %312 = vmatpush1.msra.mxu0 %v293
        %313 = vmatprep.subr.mxu0 0.0
        %314 = vmatpush1.msra.mxu0 %v294
        %315 = vmatprep.subr.mxu0 0.0
        %316 = vmatpush1.msra.mxu0 %v295
        %317 = vmatprep.subr.mxu0 0.0
        %318 = vmatpush1.msra.mxu0 0.0
        %319 = vmatprep.subr.mxu0 0.0
        %320 = vmatpush1.msra.mxu0 0.0
        %321 = vmatprep.subr.mxu0 0.0
        %322 = vmatpush1.msra.mxu0 0.0
        %323 = vmatprep.subr.mxu0 0.0
        %324 = vmatpush1.msra.mxu0 0.0
        %325 = vmatprep.subr.mxu0 0.0
        %326 = vmatpush1.msra.mxu0 0.0
        %327 = vmatprep.subr.mxu0 0.0
        %328 = vmatpush1.msra.mxu0 0.0
        %329 = vmatprep.subr.mxu0 0.0
        %330 = vmatpush1.msra.mxu0 0.0
        %331 = vmatprep.subr.mxu0 0.0
        %332 = vmatpush1.msra.mxu0 0.0
        %333 = vmatprep.subr.mxu0 0.0
        %334 = vmatpush1.msra.mxu0 0.0
        %335 = vmatprep.subr.mxu0 0.0
        %336 = vmatpush1.msra.mxu0 0.0
        %337 = vmatprep.subr.mxu0 0.0
        %338 = vmatpush1.msra.mxu0 0.0
        %339 = vmatprep.subr.mxu0 0.0
        %340 = vmatpush1.msra.mxu0 0.0
        %341 = vmatprep.subr.mxu0 0.0
        %342 = vmatpush1.msra.mxu0 0.0
        %343 = vmatprep.subr.mxu0 0.0
        %344 = vmatpush1.msra.mxu0 0.0
        %345 = vmatprep.subr.mxu0 0.0
        %346 = vmatpush1.msra.mxu0 0.0
        %347 = vmatprep.subr.mxu0 0.0
        %348 = vmatpush1.msra.mxu0 0.0
        %349 = vmatprep.subr.mxu0 0.0
        %350 = vmatpush1.msra.mxu0 0.0
        %351 = vmatprep.subr.mxu0 0.0
        %352 = vmatpush1.msra.mxu0 0.0
        %353 = vmatprep.subr.mxu0 0.0
        %354 = vmatpush1.msra.mxu0 0.0
        %355 = vmatprep.subr.mxu0 0.0
        %356 = vmatpush1.msra.mxu0 0.0
        %357 = vmatprep.subr.mxu0 0.0
        %358 = vmatpush1.msra.mxu0 0.0
        %359 = vmatprep.subr.mxu0 0.0
        %360 = vmatpush1.msra.mxu0 0.0
        %361 = vmatprep.subr.mxu0 0.0
        %362 = vmatpush1.msra.mxu0 0.0
        %363 = vmatprep.subr.mxu0 0.0
        %364 = vmatpush1.msra.mxu0 0.0
        %365 = vmatprep.mubr.f32.mxu0 0.0
        %366 = vmatmul.mubr.f32.gmra.mrb[0].mxu0 %v299
        %v367 = vpop.f32.mrb[0].mxu0
        %v368 = vadd.f32 0.0, %v367
        %v369 = vpop.f32.mrb[0].mxu0
        %370 = vdwg.mxu0
        %v371 = vsel %vm298, %v277, 0
        %373 = vmatprep.subr.mxu0 0.0
        %374 = vmatpush1.msra.mxu0 %v279
        %375 = vmatprep.subr.mxu0 0.0
        %376 = vmatpush1.msra.mxu0 %v280
        %377 = vmatprep.subr.mxu0 0.0
        %378 = vmatpush1.msra.mxu0 %v281
        %379 = vmatprep.subr.mxu0 0.0
        %380 = vmatpush1.msra.mxu0 %v282
        %381 = vmatprep.subr.mxu0 0.0
        %382 = vmatpush1.msra.mxu0 %v283
        %383 = vmatprep.subr.mxu0 0.0
        %384 = vmatpush1.msra.mxu0 %v284
        %385 = vmatprep.subr.mxu0 0.0
        %386 = vmatpush1.msra.mxu0 %v285
        %387 = vmatprep.subr.mxu0 0.0
        %388 = vmatpush1.msra.mxu0 %v286
        %389 = vmatprep.subr.mxu0 0.0
        %390 = vmatpush1.msra.mxu0 0.0
        %391 = vmatprep.subr.mxu0 0.0
        %392 = vmatpush1.msra.mxu0 0.0
        %393 = vmatprep.subr.mxu0 0.0
        %394 = vmatpush1.msra.mxu0 0.0
        %395 = vmatprep.subr.mxu0 0.0
        %396 = vmatpush1.msra.mxu0 0.0
        %397 = vmatprep.subr.mxu0 0.0
        %398 = vmatpush1.msra.mxu0 0.0
        %399 = vmatprep.subr.mxu0 0.0
        %400 = vmatpush1.msra.mxu0 0.0
        %401 = vmatprep.subr.mxu0 0.0
        %402 = vmatpush1.msra.mxu0 0.0
        %403 = vmatprep.subr.mxu0 0.0
        %404 = vmatpush1.msra.mxu0 0.0
        %405 = vmatprep.subr.mxu0 0.0
        %406 = vmatpush1.msra.mxu0 0.0
        %407 = vmatprep.subr.mxu0 0.0
        %408 = vmatpush1.msra.mxu0 0.0
        %409 = vmatprep.subr.mxu0 0.0
        %410 = vmatpush1.msra.mxu0 0.0
        %411 = vmatprep.subr.mxu0 0.0
        %412 = vmatpush1.msra.mxu0 0.0
        %413 = vmatprep.subr.mxu0 0.0
        %414 = vmatpush1.msra.mxu0 0.0
        %415 = vmatprep.subr.mxu0 0.0
        %416 = vmatpush1.msra.mxu0 0.0
        %417 = vmatprep.subr.mxu0 0.0
        %418 = vmatpush1.msra.mxu0 0.0
        %419 = vmatprep.subr.mxu0 0.0
        %420 = vmatpush1.msra.mxu0 0.0
        %421 = vmatprep.subr.mxu0 0.0
        %422 = vmatpush1.msra.mxu0 0.0
        %423 = vmatprep.subr.mxu0 0.0
        %424 = vmatpush1.msra.mxu0 0.0
        %425 = vmatprep.subr.mxu0 0.0
        %426 = vmatpush1.msra.mxu0 0.0
        %427 = vmatprep.subr.mxu0 0.0
        %428 = vmatpush1.msra.mxu0 0.0
        %429 = vmatprep.subr.mxu0 0.0
        %430 = vmatpush1.msra.mxu0 0.0
        %431 = vmatprep.subr.mxu0 0.0
        %432 = vmatpush1.msra.mxu0 0.0
        %433 = vmatprep.subr.mxu0 0.0
        %434 = vmatpush1.msra.mxu0 0.0
        %435 = vmatprep.subr.mxu0 0.0
        %436 = vmatpush1.msra.mxu0 0.0
        %437 = vmatprep.mubr.f32.mxu0 0.0
        %438 = vmatmul.mubr.f32.gmra.mrb[0].mxu0 %v371
        %v439 = vpop.f32.mrb[0].mxu0
        %v440 = vadd.f32 %v368, %v439
        %v441 = vpop.f32.mrb[0].mxu0
        %442 = vdwg.mxu0
        %s443 = scalar_lea.vmem %s1, 128
        %v444 = vld [vmem:[%s443] sm:$0xff]
        %v445 = vld [vmem:[%s443 + $0x8] sm:$0xff]
        %v446 = vld [vmem:[%s443 + $0x10] sm:$0xff]
        %v447 = vld [vmem:[%s443 + $0x18] sm:$0xff]
        %v448 = vld [vmem:[%s443 + $0x20] sm:$0xff]
        %v449 = vld [vmem:[%s443 + $0x28] sm:$0xff]
        %v450 = vld [vmem:[%s443 + $0x30] sm:$0xff]
        %v451 = vld [vmem:[%s443 + $0x38] sm:$0xff]
        %v452 = vrot.slane %v277, 2
        %v453 = vsel %vm298, %v452, 0
        %455 = vmatprep.subr.mxu0 0.0
        %456 = vmatpush1.msra.mxu0 %v444
        %457 = vmatprep.subr.mxu0 0.0
        %458 = vmatpush1.msra.mxu0 %v445
        %459 = vmatprep.subr.mxu0 0.0
        %460 = vmatpush1.msra.mxu0 %v446
        %461 = vmatprep.subr.mxu0 0.0
        %462 = vmatpush1.msra.mxu0 %v447
        %463 = vmatprep.subr.mxu0 0.0
        %464 = vmatpush1.msra.mxu0 %v448
        %465 = vmatprep.subr.mxu0 0.0
        %466 = vmatpush1.msra.mxu0 %v449
        %467 = vmatprep.subr.mxu0 0.0
        %468 = vmatpush1.msra.mxu0 %v450
        %469 = vmatprep.subr.mxu0 0.0
        %470 = vmatpush1.msra.mxu0 %v451
        %471 = vmatprep.subr.mxu0 0.0
        %472 = vmatpush1.msra.mxu0 0.0
        %473 = vmatprep.subr.mxu0 0.0
        %474 = vmatpush1.msra.mxu0 0.0
        %475 = vmatprep.subr.mxu0 0.0
        %476 = vmatpush1.msra.mxu0 0.0
        %477 = vmatprep.subr.mxu0 0.0
        %478 = vmatpush1.msra.mxu0 0.0
        %479 = vmatprep.subr.mxu0 0.0
        %480 = vmatpush1.msra.mxu0 0.0
        %481 = vmatprep.subr.mxu0 0.0
        %482 = vmatpush1.msra.mxu0 0.0
        %483 = vmatprep.subr.mxu0 0.0
        %484 = vmatpush1.msra.mxu0 0.0
        %485 = vmatprep.subr.mxu0 0.0
        %486 = vmatpush1.msra.mxu0 0.0
        %487 = vmatprep.subr.mxu0 0.0
        %488 = vmatpush1.msra.mxu0 0.0
        %489 = vmatprep.subr.mxu0 0.0
        %490 = vmatpush1.msra.mxu0 0.0
        %491 = vmatprep.subr.mxu0 0.0
        %492 = vmatpush1.msra.mxu0 0.0
        %493 = vmatprep.subr.mxu0 0.0
        %494 = vmatpush1.msra.mxu0 0.0
        %495 = vmatprep.subr.mxu0 0.0
        %496 = vmatpush1.msra.mxu0 0.0
        %497 = vmatprep.subr.mxu0 0.0
        %498 = vmatpush1.msra.mxu0 0.0
        %499 = vmatprep.subr.mxu0 0.0
        %500 = vmatpush1.msra.mxu0 0.0
        %501 = vmatprep.subr.mxu0 0.0
        %502 = vmatpush1.msra.mxu0 0.0
        %503 = vmatprep.subr.mxu0 0.0
        %504 = vmatpush1.msra.mxu0 0.0
        %505 = vmatprep.subr.mxu0 0.0
        %506 = vmatpush1.msra.mxu0 0.0
        %507 = vmatprep.subr.mxu0 0.0
        %508 = vmatpush1.msra.mxu0 0.0
        %509 = vmatprep.subr.mxu0 0.0
        %510 = vmatpush1.msra.mxu0 0.0
        %511 = vmatprep.subr.mxu0 0.0
        %512 = vmatpush1.msra.mxu0 0.0
        %513 = vmatprep.subr.mxu0 0.0
        %514 = vmatpush1.msra.mxu0 0.0
        %515 = vmatprep.subr.mxu0 0.0
        %516 = vmatpush1.msra.mxu0 0.0
        %517 = vmatprep.subr.mxu0 0.0
        %518 = vmatpush1.msra.mxu0 0.0
        %519 = vmatprep.mubr.f32.mxu0 0.0
        %520 = vmatmul.mubr.f32.gmra.mrb[0].mxu0 %v453
        %v521 = vpop.f32.mrb[0].mxu0
        %v522 = vadd.f32 0.0, %v521
        %v523 = vpop.f32.mrb[0].mxu0
        %524 = vdwg.mxu0
        %v525 = vadd.f32 %v440, %v522
        %s526 = scalar_lea.vmem %s1, 192
        %v527 = vld [vmem:[%s526] sm:$0xff]
        %v528 = vld [vmem:[%s526 + $0x8] sm:$0xff]
        %v529 = vld [vmem:[%s526 + $0x10] sm:$0xff]
        %v530 = vld [vmem:[%s526 + $0x18] sm:$0xff]
        %v531 = vld [vmem:[%s526 + $0x20] sm:$0xff]
        %v532 = vld [vmem:[%s526 + $0x28] sm:$0xff]
        %v533 = vld [vmem:[%s526 + $0x30] sm:$0xff]
        %v534 = vld [vmem:[%s526 + $0x38] sm:$0xff]
        %v535 = vrot.slane %v277, 3
        %v536 = vsel %vm298, %v535, 0
        %538 = vmatprep.subr.mxu0 0.0
        %539 = vmatpush1.msra.mxu0 %v527
        %540 = vmatprep.subr.mxu0 0.0
        %541 = vmatpush1.msra.mxu0 %v528
        %542 = vmatprep.subr.mxu0 0.0
        %543 = vmatpush1.msra.mxu0 %v529
        %544 = vmatprep.subr.mxu0 0.0
        %545 = vmatpush1.msra.mxu0 %v530
        %546 = vmatprep.subr.mxu0 0.0
        %547 = vmatpush1.msra.mxu0 %v531
        %548 = vmatprep.subr.mxu0 0.0
        %549 = vmatpush1.msra.mxu0 %v532
        %550 = vmatprep.subr.mxu0 0.0
        %551 = vmatpush1.msra.mxu0 %v533
        %552 = vmatprep.subr.mxu0 0.0
        %553 = vmatpush1.msra.mxu0 %v534
        %554 = vmatprep.subr.mxu0 0.0
        %555 = vmatpush1.msra.mxu0 0.0
        %556 = vmatprep.subr.mxu0 0.0
        %557 = vmatpush1.msra.mxu0 0.0
        %558 = vmatprep.subr.mxu0 0.0
        %559 = vmatpush1.msra.mxu0 0.0
        %560 = vmatprep.subr.mxu0 0.0
        %561 = vmatpush1.msra.mxu0 0.0
        %562 = vmatprep.subr.mxu0 0.0
        %563 = vmatpush1.msra.mxu0 0.0
        %564 = vmatprep.subr.mxu0 0.0
        %565 = vmatpush1.msra.mxu0 0.0
        %566 = vmatprep.subr.mxu0 0.0
        %567 = vmatpush1.msra.mxu0 0.0
        %568 = vmatprep.subr.mxu0 0.0
        %569 = vmatpush1.msra.mxu0 0.0
        %570 = vmatprep.subr.mxu0 0.0
        %571 = vmatpush1.msra.mxu0 0.0
        %572 = vmatprep.subr.mxu0 0.0
        %573 = vmatpush1.msra.mxu0 0.0
        %574 = vmatprep.subr.mxu0 0.0
        %575 = vmatpush1.msra.mxu0 0.0
        %576 = vmatprep.subr.mxu0 0.0
        %577 = vmatpush1.msra.mxu0 0.0
        %578 = vmatprep.subr.mxu0 0.0
        %579 = vmatpush1.msra.mxu0 0.0
        %580 = vmatprep.subr.mxu0 0.0
        %581 = vmatpush1.msra.mxu0 0.0
        %582 = vmatprep.subr.mxu0 0.0
        %583 = vmatpush1.msra.mxu0 0.0
        %584 = vmatprep.subr.mxu0 0.0
        %585 = vmatpush1.msra.mxu0 0.0
        %586 = vmatprep.subr.mxu0 0.0
        %587 = vmatpush1.msra.mxu0 0.0
        %588 = vmatprep.subr.mxu0 0.0
        %589 = vmatpush1.msra.mxu0 0.0
        %590 = vmatprep.subr.mxu0 0.0
        %591 = vmatpush1.msra.mxu0 0.0
        %592 = vmatprep.subr.mxu0 0.0
        %593 = vmatpush1.msra.mxu0 0.0
        %594 = vmatprep.subr.mxu0 0.0
        %595 = vmatpush1.msra.mxu0 0.0
        %596 = vmatprep.subr.mxu0 0.0
        %597 = vmatpush1.msra.mxu0 0.0
        %598 = vmatprep.subr.mxu0 0.0
        %599 = vmatpush1.msra.mxu0 0.0
        %600 = vmatprep.subr.mxu0 0.0
        %601 = vmatpush1.msra.mxu0 0.0
        %602 = vmatprep.mubr.f32.mxu0 0.0
        %603 = vmatmul.mubr.f32.gmra.mrb[0].mxu0 %v536
        %v604 = vpop.f32.mrb[0].mxu0
        %v605 = vadd.f32 0.0, %v604
        %v606 = vpop.f32.mrb[0].mxu0
        %607 = vdwg.mxu0
        %v608 = vadd.f32 %v525, %v605
        %s609 = scalar_lea.vmem %s1, 256
        %v610 = vld [vmem:[%s609] sm:$0xff]
        %v611 = vld [vmem:[%s609 + $0x8] sm:$0xff]
        %v612 = vld [vmem:[%s609 + $0x10] sm:$0xff]
        %v613 = vld [vmem:[%s609 + $0x18] sm:$0xff]
        %v614 = vld [vmem:[%s609 + $0x20] sm:$0xff]
        %v615 = vld [vmem:[%s609 + $0x28] sm:$0xff]
        %v616 = vld [vmem:[%s609 + $0x30] sm:$0xff]
        %v617 = vld [vmem:[%s609 + $0x38] sm:$0xff]
        %v618 = vrot.slane %v277, 4
        %v619 = vsel %vm298, %v618, 0
        %621 = vmatprep.subr.mxu0 0.0
        %622 = vmatpush1.msra.mxu0 %v610
        %623 = vmatprep.subr.mxu0 0.0
        %624 = vmatpush1.msra.mxu0 %v611
        %625 = vmatprep.subr.mxu0 0.0
        %626 = vmatpush1.msra.mxu0 %v612
        %627 = vmatprep.subr.mxu0 0.0
        %628 = vmatpush1.msra.mxu0 %v613
        %629 = vmatprep.subr.mxu0 0.0
        %630 = vmatpush1.msra.mxu0 %v614
        %631 = vmatprep.subr.mxu0 0.0
        %632 = vmatpush1.msra.mxu0 %v615
        %633 = vmatprep.subr.mxu0 0.0
        %634 = vmatpush1.msra.mxu0 %v616
        %635 = vmatprep.subr.mxu0 0.0
        %636 = vmatpush1.msra.mxu0 %v617
        %637 = vmatprep.subr.mxu0 0.0
        %638 = vmatpush1.msra.mxu0 0.0
        %639 = vmatprep.subr.mxu0 0.0
        %640 = vmatpush1.msra.mxu0 0.0
        %641 = vmatprep.subr.mxu0 0.0
        %642 = vmatpush1.msra.mxu0 0.0
        %643 = vmatprep.subr.mxu0 0.0
        %644 = vmatpush1.msra.mxu0 0.0
        %645 = vmatprep.subr.mxu0 0.0
        %646 = vmatpush1.msra.mxu0 0.0
        %647 = vmatprep.subr.mxu0 0.0
        %648 = vmatpush1.msra.mxu0 0.0
        %649 = vmatprep.subr.mxu0 0.0
        %650 = vmatpush1.msra.mxu0 0.0
        %651 = vmatprep.subr.mxu0 0.0
        %652 = vmatpush1.msra.mxu0 0.0
        %653 = vmatprep.subr.mxu0 0.0
        %654 = vmatpush1.msra.mxu0 0.0
        %655 = vmatprep.subr.mxu0 0.0
        %656 = vmatpush1.msra.mxu0 0.0
        %657 = vmatprep.subr.mxu0 0.0
        %658 = vmatpush1.msra.mxu0 0.0
        %659 = vmatprep.subr.mxu0 0.0
        %660 = vmatpush1.msra.mxu0 0.0
        %661 = vmatprep.subr.mxu0 0.0
        %662 = vmatpush1.msra.mxu0 0.0
        %663 = vmatprep.subr.mxu0 0.0
        %664 = vmatpush1.msra.mxu0 0.0
        %665 = vmatprep.subr.mxu0 0.0
        %666 = vmatpush1.msra.mxu0 0.0
        %667 = vmatprep.subr.mxu0 0.0
        %668 = vmatpush1.msra.mxu0 0.0
        %669 = vmatprep.subr.mxu0 0.0
        %670 = vmatpush1.msra.mxu0 0.0
        %671 = vmatprep.subr.mxu0 0.0
        %672 = vmatpush1.msra.mxu0 0.0
        %673 = vmatprep.subr.mxu0 0.0
        %674 = vmatpush1.msra.mxu0 0.0
        %675 = vmatprep.subr.mxu0 0.0
        %676 = vmatpush1.msra.mxu0 0.0
        %677 = vmatprep.subr.mxu0 0.0
        %678 = vmatpush1.msra.mxu0 0.0
        %679 = vmatprep.subr.mxu0 0.0
        %680 = vmatpush1.msra.mxu0 0.0
        %681 = vmatprep.subr.mxu0 0.0
        %682 = vmatpush1.msra.mxu0 0.0
        %683 = vmatprep.subr.mxu0 0.0
        %684 = vmatpush1.msra.mxu0 0.0
        %685 = vmatprep.mubr.f32.mxu0 0.0
        %686 = vmatmul.mubr.f32.gmra.mrb[0].mxu0 %v619
        %v687 = vpop.f32.mrb[0].mxu0
        %v688 = vadd.f32 0.0, %v687
        %v689 = vpop.f32.mrb[0].mxu0
        %690 = vdwg.mxu0
        %v691 = vadd.f32 %v608, %v688
        %s692 = scalar_lea.vmem %s1, 320
        %v693 = vld [vmem:[%s692] sm:$0xff]
        %v694 = vld [vmem:[%s692 + $0x8] sm:$0xff]
        %v695 = vld [vmem:[%s692 + $0x10] sm:$0xff]
        %v696 = vld [vmem:[%s692 + $0x18] sm:$0xff]
        %v697 = vld [vmem:[%s692 + $0x20] sm:$0xff]
        %v698 = vld [vmem:[%s692 + $0x28] sm:$0xff]
        %v699 = vld [vmem:[%s692 + $0x30] sm:$0xff]
        %v700 = vld [vmem:[%s692 + $0x38] sm:$0xff]
        %vm702 = vcmask 1042432
        %v703 = vrot.slane %v277, 5
        %v704 = vrot.slane %v278, 5
        %v705 = vsel %vm702, %v703, %v704
        %v706 = vsel %vm298, %v705, 0
        %708 = vmatprep.subr.mxu0 0.0
        %709 = vmatpush1.msra.mxu0 %v693
        %710 = vmatprep.subr.mxu0 0.0
        %711 = vmatpush1.msra.mxu0 %v694
        %712 = vmatprep.subr.mxu0 0.0
        %713 = vmatpush1.msra.mxu0 %v695
        %714 = vmatprep.subr.mxu0 0.0
        %715 = vmatpush1.msra.mxu0 %v696
        %716 = vmatprep.subr.mxu0 0.0
        %717 = vmatpush1.msra.mxu0 %v697
        %718 = vmatprep.subr.mxu0 0.0
        %719 = vmatpush1.msra.mxu0 %v698
        %720 = vmatprep.subr.mxu0 0.0
        %721 = vmatpush1.msra.mxu0 %v699
        %722 = vmatprep.subr.mxu0 0.0
        %723 = vmatpush1.msra.mxu0 %v700
        %724 = vmatprep.subr.mxu0 0.0
        %725 = vmatpush1.msra.mxu0 0.0
        %726 = vmatprep.subr.mxu0 0.0
        %727 = vmatpush1.msra.mxu0 0.0
        %728 = vmatprep.subr.mxu0 0.0
        %729 = vmatpush1.msra.mxu0 0.0
        %730 = vmatprep.subr.mxu0 0.0
        %731 = vmatpush1.msra.mxu0 0.0
        %732 = vmatprep.subr.mxu0 0.0
        %733 = vmatpush1.msra.mxu0 0.0
        %734 = vmatprep.subr.mxu0 0.0
        %735 = vmatpush1.msra.mxu0 0.0
        %736 = vmatprep.subr.mxu0 0.0
        %737 = vmatpush1.msra.mxu0 0.0
        %738 = vmatprep.subr.mxu0 0.0
        %739 = vmatpush1.msra.mxu0 0.0
        %740 = vmatprep.subr.mxu0 0.0
        %741 = vmatpush1.msra.mxu0 0.0
        %742 = vmatprep.subr.mxu0 0.0
        %743 = vmatpush1.msra.mxu0 0.0
        %744 = vmatprep.subr.mxu0 0.0
        %745 = vmatpush1.msra.mxu0 0.0
        %746 = vmatprep.subr.mxu0 0.0
        %747 = vmatpush1.msra.mxu0 0.0
        %748 = vmatprep.subr.mxu0 0.0
        %749 = vmatpush1.msra.mxu0 0.0
        %750 = vmatprep.subr.mxu0 0.0
        %751 = vmatpush1.msra.mxu0 0.0
        %752 = vmatprep.subr.mxu0 0.0
        %753 = vmatpush1.msra.mxu0 0.0
        %754 = vmatprep.subr.mxu0 0.0
        %755 = vmatpush1.msra.mxu0 0.0
        %756 = vmatprep.subr.mxu0 0.0
        %757 = vmatpush1.msra.mxu0 0.0
        %758 = vmatprep.subr.mxu0 0.0
        %759 = vmatpush1.msra.mxu0 0.0
        %760 = vmatprep.subr.mxu0 0.0
        %761 = vmatpush1.msra.mxu0 0.0
        %762 = vmatprep.subr.mxu0 0.0
        %763 = vmatpush1.msra.mxu0 0.0
        %764 = vmatprep.subr.mxu0 0.0
        %765 = vmatpush1.msra.mxu0 0.0
        %766 = vmatprep.subr.mxu0 0.0
        %767 = vmatpush1.msra.mxu0 0.0
        %768 = vmatprep.subr.mxu0 0.0
        %769 = vmatpush1.msra.mxu0 0.0
        %770 = vmatprep.subr.mxu0 0.0
        %771 = vmatpush1.msra.mxu0 0.0
        %772 = vmatprep.mubr.f32.mxu0 0.0
        %773 = vmatmul.mubr.f32.gmra.mrb[0].mxu0 %v706
        %v774 = vpop.f32.mrb[0].mxu0
        %v775 = vadd.f32 0.0, %v774
        %v776 = vpop.f32.mrb[0].mxu0
        %777 = vdwg.mxu0
        %v778 = vadd.f32 %v691, %v775
        %s779 = scalar_lea.vmem %s1, 384
        %v780 = vld [vmem:[%s779] sm:$0xff]
        %v781 = vld [vmem:[%s779 + $0x8] sm:$0xff]
        %v782 = vld [vmem:[%s779 + $0x10] sm:$0xff]
        %v783 = vld [vmem:[%s779 + $0x18] sm:$0xff]
        %v784 = vld [vmem:[%s779 + $0x20] sm:$0xff]
        %v785 = vld [vmem:[%s779 + $0x28] sm:$0xff]
        %v786 = vld [vmem:[%s779 + $0x30] sm:$0xff]
        %v787 = vld [vmem:[%s779 + $0x38] sm:$0xff]
        %vm788 = vcmask 1041408
        %v789 = vrot.slane %v277, 6
        %v790 = vrot.slane %v278, 6
        %v791 = vsel %vm788, %v789, %v790
        %v792 = vsel %vm298, %v791, 0
        %794 = vmatprep.subr.mxu0 0.0
        %795 = vmatpush1.msra.mxu0 %v780
        %796 = vmatprep.subr.mxu0 0.0
        %797 = vmatpush1.msra.mxu0 %v781
        %798 = vmatprep.subr.mxu0 0.0
        %799 = vmatpush1.msra.mxu0 %v782
        %800 = vmatprep.subr.mxu0 0.0
        %801 = vmatpush1.msra.mxu0 %v783
        %802 = vmatprep.subr.mxu0 0.0
        %803 = vmatpush1.msra.mxu0 %v784
        %804 = vmatprep.subr.mxu0 0.0
        %805 = vmatpush1.msra.mxu0 %v785
        %806 = vmatprep.subr.mxu0 0.0
        %807 = vmatpush1.msra.mxu0 %v786
        %808 = vmatprep.subr.mxu0 0.0
        %809 = vmatpush1.msra.mxu0 %v787
        %810 = vmatprep.subr.mxu0 0.0
        %811 = vmatpush1.msra.mxu0 0.0
        %812 = vmatprep.subr.mxu0 0.0
        %813 = vmatpush1.msra.mxu0 0.0
        %814 = vmatprep.subr.mxu0 0.0
        %815 = vmatpush1.msra.mxu0 0.0
        %816 = vmatprep.subr.mxu0 0.0
        %817 = vmatpush1.msra.mxu0 0.0
        %818 = vmatprep.subr.mxu0 0.0
        %819 = vmatpush1.msra.mxu0 0.0
        %820 = vmatprep.subr.mxu0 0.0
        %821 = vmatpush1.msra.mxu0 0.0
        %822 = vmatprep.subr.mxu0 0.0
        %823 = vmatpush1.msra.mxu0 0.0
        %824 = vmatprep.subr.mxu0 0.0
        %825 = vmatpush1.msra.mxu0 0.0
        %826 = vmatprep.subr.mxu0 0.0
        %827 = vmatpush1.msra.mxu0 0.0
        %828 = vmatprep.subr.mxu0 0.0
        %829 = vmatpush1.msra.mxu0 0.0
        %830 = vmatprep.subr.mxu0 0.0
        %831 = vmatpush1.msra.mxu0 0.0
        %832 = vmatprep.subr.mxu0 0.0
        %833 = vmatpush1.msra.mxu0 0.0
        %834 = vmatprep.subr.mxu0 0.0
        %835 = vmatpush1.msra.mxu0 0.0
        %836 = vmatprep.subr.mxu0 0.0
        %837 = vmatpush1.msra.mxu0 0.0
        %838 = vmatprep.subr.mxu0 0.0
        %839 = vmatpush1.msra.mxu0 0.0
        %840 = vmatprep.subr.mxu0 0.0
        %841 = vmatpush1.msra.mxu0 0.0
        %842 = vmatprep.subr.mxu0 0.0
        %843 = vmatpush1.msra.mxu0 0.0
        %844 = vmatprep.subr.mxu0 0.0
        %845 = vmatpush1.msra.mxu0 0.0
        %846 = vmatprep.subr.mxu0 0.0
        %847 = vmatpush1.msra.mxu0 0.0
        %848 = vmatprep.subr.mxu0 0.0
        %849 = vmatpush1.msra.mxu0 0.0
        %850 = vmatprep.subr.mxu0 0.0
        %851 = vmatpush1.msra.mxu0 0.0
        %852 = vmatprep.subr.mxu0 0.0
        %853 = vmatpush1.msra.mxu0 0.0
        %854 = vmatprep.subr.mxu0 0.0
        %855 = vmatpush1.msra.mxu0 0.0
        %856 = vmatprep.subr.mxu0 0.0
        %857 = vmatpush1.msra.mxu0 0.0
        %858 = vmatprep.mubr.f32.mxu0 0.0
        %859 = vmatmul.mubr.f32.gmra.mrb[0].mxu0 %v792
        %v860 = vpop.f32.mrb[0].mxu0
        %v861 = vadd.f32 0.0, %v860
        %v862 = vpop.f32.mrb[0].mxu0
        %863 = vdwg.mxu0
        %v864 = vadd.f32 %v778, %v861
        %s865 = scalar_lea.vmem %s1, 448
        %v866 = vld [vmem:[%s865] sm:$0xff]
        %v867 = vld [vmem:[%s865 + $0x8] sm:$0xff]
        %v868 = vld [vmem:[%s865 + $0x10] sm:$0xff]
        %v869 = vld [vmem:[%s865 + $0x18] sm:$0xff]
        %v870 = vld [vmem:[%s865 + $0x20] sm:$0xff]
        %v871 = vld [vmem:[%s865 + $0x28] sm:$0xff]
        %v872 = vld [vmem:[%s865 + $0x30] sm:$0xff]
        %v873 = vld [vmem:[%s865 + $0x38] sm:$0xff]
        %vm874 = vcmask 1040384
        %v875 = vrot.slane %v277, 7
        %v876 = vrot.slane %v278, 7
        %v877 = vsel %vm874, %v875, %v876
        %v878 = vsel %vm298, %v877, 0
        %880 = vmatprep.subr.mxu0 0.0
        %881 = vmatpush1.msra.mxu0 %v866
        %882 = vmatprep.subr.mxu0 0.0
        %883 = vmatpush1.msra.mxu0 %v867
        %884 = vmatprep.subr.mxu0 0.0
        %885 = vmatpush1.msra.mxu0 %v868
        %886 = vmatprep.subr.mxu0 0.0
        %887 = vmatpush1.msra.mxu0 %v869
        %888 = vmatprep.subr.mxu0 0.0
        %889 = vmatpush1.msra.mxu0 %v870
        %890 = vmatprep.subr.mxu0 0.0
        %891 = vmatpush1.msra.mxu0 %v871
        %892 = vmatprep.subr.mxu0 0.0
        %893 = vmatpush1.msra.mxu0 %v872
        %894 = vmatprep.subr.mxu0 0.0
        %895 = vmatpush1.msra.mxu0 %v873
        %896 = vmatprep.subr.mxu0 0.0
        %897 = vmatpush1.msra.mxu0 0.0
        %898 = vmatprep.subr.mxu0 0.0
        %899 = vmatpush1.msra.mxu0 0.0
        %900 = vmatprep.subr.mxu0 0.0
        %901 = vmatpush1.msra.mxu0 0.0
        %902 = vmatprep.subr.mxu0 0.0
        %903 = vmatpush1.msra.mxu0 0.0
        %904 = vmatprep.subr.mxu0 0.0
        %905 = vmatpush1.msra.mxu0 0.0
        %906 = vmatprep.subr.mxu0 0.0
        %907 = vmatpush1.msra.mxu0 0.0
        %908 = vmatprep.subr.mxu0 0.0
        %909 = vmatpush1.msra.mxu0 0.0
        %910 = vmatprep.subr.mxu0 0.0
        %911 = vmatpush1.msra.mxu0 0.0
        %912 = vmatprep.subr.mxu0 0.0
        %913 = vmatpush1.msra.mxu0 0.0
        %914 = vmatprep.subr.mxu0 0.0
        %915 = vmatpush1.msra.mxu0 0.0
        %916 = vmatprep.subr.mxu0 0.0
        %917 = vmatpush1.msra.mxu0 0.0
        %918 = vmatprep.subr.mxu0 0.0
        %919 = vmatpush1.msra.mxu0 0.0
        %920 = vmatprep.subr.mxu0 0.0
        %921 = vmatpush1.msra.mxu0 0.0
        %922 = vmatprep.subr.mxu0 0.0
        %923 = vmatpush1.msra.mxu0 0.0
        %924 = vmatprep.subr.mxu0 0.0
        %925 = vmatpush1.msra.mxu0 0.0
        %926 = vmatprep.subr.mxu0 0.0
        %927 = vmatpush1.msra.mxu0 0.0
        %928 = vmatprep.subr.mxu0 0.0
        %929 = vmatpush1.msra.mxu0 0.0
        %930 = vmatprep.subr.mxu0 0.0
        %931 = vmatpush1.msra.mxu0 0.0
        %932 = vmatprep.subr.mxu0 0.0
        %933 = vmatpush1.msra.mxu0 0.0
        %934 = vmatprep.subr.mxu0 0.0
        %935 = vmatpush1.msra.mxu0 0.0
        %936 = vmatprep.subr.mxu0 0.0
        %937 = vmatpush1.msra.mxu0 0.0
        %938 = vmatprep.subr.mxu0 0.0
        %939 = vmatpush1.msra.mxu0 0.0
        %940 = vmatprep.subr.mxu0 0.0
        %941 = vmatpush1.msra.mxu0 0.0
        %942 = vmatprep.subr.mxu0 0.0
        %943 = vmatpush1.msra.mxu0 0.0
        %944 = vmatprep.mubr.f32.mxu0 0.0
        %945 = vmatmul.mubr.f32.gmra.mrb[0].mxu0 %v878
        %v946 = vpop.f32.mrb[0].mxu0
        %v947 = vadd.f32 0.0, %v946
        %v948 = vpop.f32.mrb[0].mxu0
        %949 = vdwg.mxu0
        %v950 = vadd.f32 %v864, %v947
        %s951 = scalar_lea.vmem %s1, 512
        %v952 = vld [vmem:[%s951] sm:$0xff]
        %v953 = vld [vmem:[%s951 + $0x8] sm:$0xff]
        %v954 = vld [vmem:[%s951 + $0x10] sm:$0xff]
        %v955 = vld [vmem:[%s951 + $0x18] sm:$0xff]
        %v956 = vld [vmem:[%s951 + $0x20] sm:$0xff]
        %v957 = vld [vmem:[%s951 + $0x28] sm:$0xff]
        %v958 = vld [vmem:[%s951 + $0x30] sm:$0xff]
        %v959 = vld [vmem:[%s951 + $0x38] sm:$0xff]
        %v960 = vsel %vm298, %v278, 0
        %962 = vmatprep.subr.mxu0 0.0
        %963 = vmatpush1.msra.mxu0 %v952
        %964 = vmatprep.subr.mxu0 0.0
        %965 = vmatpush1.msra.mxu0 %v953
        %966 = vmatprep.subr.mxu0 0.0
        %967 = vmatpush1.msra.mxu0 %v954
        %968 = vmatprep.subr.mxu0 0.0
        %969 = vmatpush1.msra.mxu0 %v955
        %970 = vmatprep.subr.mxu0 0.0
        %971 = vmatpush1.msra.mxu0 %v956
        %972 = vmatprep.subr.mxu0 0.0
        %973 = vmatpush1.msra.mxu0 %v957
        %974 = vmatprep.subr.mxu0 0.0
        %975 = vmatpush1.msra.mxu0 %v958
        %976 = vmatprep.subr.mxu0 0.0
        %977 = vmatpush1.msra.mxu0 %v959
        %978 = vmatprep.subr.mxu0 0.0
        %979 = vmatpush1.msra.mxu0 0.0
        %980 = vmatprep.subr.mxu0 0.0
        %981 = vmatpush1.msra.mxu0 0.0
        %982 = vmatprep.subr.mxu0 0.0
        %983 = vmatpush1.msra.mxu0 0.0
        %984 = vmatprep.subr.mxu0 0.0
        %985 = vmatpush1.msra.mxu0 0.0
        %986 = vmatprep.subr.mxu0 0.0
        %987 = vmatpush1.msra.mxu0 0.0
        %988 = vmatprep.subr.mxu0 0.0
        %989 = vmatpush1.msra.mxu0 0.0
        %990 = vmatprep.subr.mxu0 0.0
        %991 = vmatpush1.msra.mxu0 0.0
        %992 = vmatprep.subr.mxu0 0.0
        %993 = vmatpush1.msra.mxu0 0.0
        %994 = vmatprep.subr.mxu0 0.0
        %995 = vmatpush1.msra.mxu0 0.0
        %996 = vmatprep.subr.mxu0 0.0
        %997 = vmatpush1.msra.mxu0 0.0
        %998 = vmatprep.subr.mxu0 0.0
        %999 = vmatpush1.msra.mxu0 0.0
        %1000 = vmatprep.subr.mxu0 0.0
        %1001 = vmatpush1.msra.mxu0 0.0
        %1002 = vmatprep.subr.mxu0 0.0
        %1003 = vmatpush1.msra.mxu0 0.0
        %1004 = vmatprep.subr.mxu0 0.0
        %1005 = vmatpush1.msra.mxu0 0.0
        %1006 = vmatprep.subr.mxu0 0.0
        %1007 = vmatpush1.msra.mxu0 0.0
        %1008 = vmatprep.subr.mxu0 0.0
        %1009 = vmatpush1.msra.mxu0 0.0
        %1010 = vmatprep.subr.mxu0 0.0
        %1011 = vmatpush1.msra.mxu0 0.0
        %1012 = vmatprep.subr.mxu0 0.0
        %1013 = vmatpush1.msra.mxu0 0.0
        %1014 = vmatprep.subr.mxu0 0.0
        %1015 = vmatpush1.msra.mxu0 0.0
        %1016 = vmatprep.subr.mxu0 0.0
        %1017 = vmatpush1.msra.mxu0 0.0
        %1018 = vmatprep.subr.mxu0 0.0
        %1019 = vmatpush1.msra.mxu0 0.0
        %1020 = vmatprep.subr.mxu0 0.0
        %1021 = vmatpush1.msra.mxu0 0.0
        %1022 = vmatprep.subr.mxu0 0.0
        %1023 = vmatpush1.msra.mxu0 0.0
        %1024 = vmatprep.subr.mxu0 0.0
        %1025 = vmatpush1.msra.mxu0 0.0
        %1026 = vmatprep.mubr.f32.mxu0 0.0
        %1027 = vmatmul.mubr.f32.gmra.mrb[0].mxu0 %v960
        %v1028 = vpop.f32.mrb[0].mxu0
        %v1029 = vadd.f32 0.0, %v1028
        %v1030 = vpop.f32.mrb[0].mxu0
        %1031 = vdwg.mxu0
        %v1032 = vadd.f32 %v950, %v1029
        %s1033 = scalar_lea.vmem %s1, 576
        %v1034 = vld [vmem:[%s1033] sm:$0xff]
        %v1035 = vld [vmem:[%s1033 + $0x8] sm:$0xff]
        %v1036 = vld [vmem:[%s1033 + $0x10] sm:$0xff]
        %v1037 = vld [vmem:[%s1033 + $0x18] sm:$0xff]
        %v1038 = vld [vmem:[%s1033 + $0x20] sm:$0xff]
        %v1039 = vld [vmem:[%s1033 + $0x28] sm:$0xff]
        %v1040 = vld [vmem:[%s1033 + $0x30] sm:$0xff]
        %v1041 = vld [vmem:[%s1033 + $0x38] sm:$0xff]
        %v1042 = vrot.slane %v278, 1
        %v1043 = vsel %vm298, %v1042, 0
        %1045 = vmatprep.subr.mxu0 0.0
        %1046 = vmatpush1.msra.mxu0 %v1034
        %1047 = vmatprep.subr.mxu0 0.0
        %1048 = vmatpush1.msra.mxu0 %v1035
        %1049 = vmatprep.subr.mxu0 0.0
        %1050 = vmatpush1.msra.mxu0 %v1036
        %1051 = vmatprep.subr.mxu0 0.0
        %1052 = vmatpush1.msra.mxu0 %v1037
        %1053 = vmatprep.subr.mxu0 0.0
        %1054 = vmatpush1.msra.mxu0 %v1038
        %1055 = vmatprep.subr.mxu0 0.0
        %1056 = vmatpush1.msra.mxu0 %v1039
        %1057 = vmatprep.subr.mxu0 0.0
        %1058 = vmatpush1.msra.mxu0 %v1040
        %1059 = vmatprep.subr.mxu0 0.0
        %1060 = vmatpush1.msra.mxu0 %v1041
        %1061 = vmatprep.subr.mxu0 0.0
        %1062 = vmatpush1.msra.mxu0 0.0
        %1063 = vmatprep.subr.mxu0 0.0
        %1064 = vmatpush1.msra.mxu0 0.0
        %1065 = vmatprep.subr.mxu0 0.0
        %1066 = vmatpush1.msra.mxu0 0.0
        %1067 = vmatprep.subr.mxu0 0.0
        %1068 = vmatpush1.msra.mxu0 0.0
        %1069 = vmatprep.subr.mxu0 0.0
        %1070 = vmatpush1.msra.mxu0 0.0
        %1071 = vmatprep.subr.mxu0 0.0
        %1072 = vmatpush1.msra.mxu0 0.0
        %1073 = vmatprep.subr.mxu0 0.0
        %1074 = vmatpush1.msra.mxu0 0.0
        %1075 = vmatprep.subr.mxu0 0.0
        %1076 = vmatpush1.msra.mxu0 0.0
        %1077 = vmatprep.subr.mxu0 0.0
        %1078 = vmatpush1.msra.mxu0 0.0
        %1079 = vmatprep.subr.mxu0 0.0
        %1080 = vmatpush1.msra.mxu0 0.0
        %1081 = vmatprep.subr.mxu0 0.0
        %1082 = vmatpush1.msra.mxu0 0.0
        %1083 = vmatprep.subr.mxu0 0.0
        %1084 = vmatpush1.msra.mxu0 0.0
        %1085 = vmatprep.subr.mxu0 0.0
        %1086 = vmatpush1.msra.mxu0 0.0
        %1087 = vmatprep.subr.mxu0 0.0
        %1088 = vmatpush1.msra.mxu0 0.0
        %1089 = vmatprep.subr.mxu0 0.0
        %1090 = vmatpush1.msra.mxu0 0.0
        %1091 = vmatprep.subr.mxu0 0.0
        %1092 = vmatpush1.msra.mxu0 0.0
        %1093 = vmatprep.subr.mxu0 0.0
        %1094 = vmatpush1.msra.mxu0 0.0
        %1095 = vmatprep.subr.mxu0 0.0
        %1096 = vmatpush1.msra.mxu0 0.0
        %1097 = vmatprep.subr.mxu0 0.0
        %1098 = vmatpush1.msra.mxu0 0.0
        %1099 = vmatprep.subr.mxu0 0.0
        %1100 = vmatpush1.msra.mxu0 0.0
        %1101 = vmatprep.subr.mxu0 0.0
        %1102 = vmatpush1.msra.mxu0 0.0
        %1103 = vmatprep.subr.mxu0 0.0
        %1104 = vmatpush1.msra.mxu0 0.0
        %1105 = vmatprep.subr.mxu0 0.0
        %1106 = vmatpush1.msra.mxu0 0.0
        %1107 = vmatprep.subr.mxu0 0.0
        %1108 = vmatpush1.msra.mxu0 0.0
        %1109 = vmatprep.mubr.f32.mxu0 0.0
        %1110 = vmatmul.mubr.f32.gmra.mrb[0].mxu0 %v1043
        %v1111 = vpop.f32.mrb[0].mxu0
        %v1112 = vadd.f32 0.0, %v1111
        %v1113 = vpop.f32.mrb[0].mxu0
        %1114 = vdwg.mxu0
        %v1115 = vadd.f32 %v1032, %v1112
        %s1116 = scalar_lea.vmem %s1, 640
        %v1117 = vld [vmem:[%s1116] sm:$0xff]
        %v1118 = vld [vmem:[%s1116 + $0x8] sm:$0xff]
        %v1119 = vld [vmem:[%s1116 + $0x10] sm:$0xff]
        %v1120 = vld [vmem:[%s1116 + $0x18] sm:$0xff]
        %v1121 = vld [vmem:[%s1116 + $0x20] sm:$0xff]
        %v1122 = vld [vmem:[%s1116 + $0x28] sm:$0xff]
        %v1123 = vld [vmem:[%s1116 + $0x30] sm:$0xff]
        %v1124 = vld [vmem:[%s1116 + $0x38] sm:$0xff]
        %v1125 = vrot.slane %v278, 2
        %v1126 = vsel %vm298, %v1125, 0
        %1128 = vmatprep.subr.mxu0 0.0
        %1129 = vmatpush1.msra.mxu0 %v1117
        %1130 = vmatprep.subr.mxu0 0.0
        %1131 = vmatpush1.msra.mxu0 %v1118
        %1132 = vmatprep.subr.mxu0 0.0
        %1133 = vmatpush1.msra.mxu0 %v1119
        %1134 = vmatprep.subr.mxu0 0.0
        %1135 = vmatpush1.msra.mxu0 %v1120
        %1136 = vmatprep.subr.mxu0 0.0
        %1137 = vmatpush1.msra.mxu0 %v1121
        %1138 = vmatprep.subr.mxu0 0.0
        %1139 = vmatpush1.msra.mxu0 %v1122
        %1140 = vmatprep.subr.mxu0 0.0
        %1141 = vmatpush1.msra.mxu0 %v1123
        %1142 = vmatprep.subr.mxu0 0.0
        %1143 = vmatpush1.msra.mxu0 %v1124
        %1144 = vmatprep.subr.mxu0 0.0
        %1145 = vmatpush1.msra.mxu0 0.0
        %1146 = vmatprep.subr.mxu0 0.0
        %1147 = vmatpush1.msra.mxu0 0.0
        %1148 = vmatprep.subr.mxu0 0.0
        %1149 = vmatpush1.msra.mxu0 0.0
        %1150 = vmatprep.subr.mxu0 0.0
        %1151 = vmatpush1.msra.mxu0 0.0
        %1152 = vmatprep.subr.mxu0 0.0
        %1153 = vmatpush1.msra.mxu0 0.0
        %1154 = vmatprep.subr.mxu0 0.0
        %1155 = vmatpush1.msra.mxu0 0.0
        %1156 = vmatprep.subr.mxu0 0.0
        %1157 = vmatpush1.msra.mxu0 0.0
        %1158 = vmatprep.subr.mxu0 0.0
        %1159 = vmatpush1.msra.mxu0 0.0
        %1160 = vmatprep.subr.mxu0 0.0
        %1161 = vmatpush1.msra.mxu0 0.0
        %1162 = vmatprep.subr.mxu0 0.0
        %1163 = vmatpush1.msra.mxu0 0.0
        %1164 = vmatprep.subr.mxu0 0.0
        %1165 = vmatpush1.msra.mxu0 0.0
        %1166 = vmatprep.subr.mxu0 0.0
        %1167 = vmatpush1.msra.mxu0 0.0
        %1168 = vmatprep.subr.mxu0 0.0
        %1169 = vmatpush1.msra.mxu0 0.0
        %1170 = vmatprep.subr.mxu0 0.0
        %1171 = vmatpush1.msra.mxu0 0.0
        %1172 = vmatprep.subr.mxu0 0.0
        %1173 = vmatpush1.msra.mxu0 0.0
        %1174 = vmatprep.subr.mxu0 0.0
        %1175 = vmatpush1.msra.mxu0 0.0
        %1176 = vmatprep.subr.mxu0 0.0
        %1177 = vmatpush1.msra.mxu0 0.0
        %1178 = vmatprep.subr.mxu0 0.0
        %1179 = vmatpush1.msra.mxu0 0.0
        %1180 = vmatprep.subr.mxu0 0.0
        %1181 = vmatpush1.msra.mxu0 0.0
        %1182 = vmatprep.subr.mxu0 0.0
        %1183 = vmatpush1.msra.mxu0 0.0
        %1184 = vmatprep.subr.mxu0 0.0
        %1185 = vmatpush1.msra.mxu0 0.0
        %1186 = vmatprep.subr.mxu0 0.0
        %1187 = vmatpush1.msra.mxu0 0.0
        %1188 = vmatprep.subr.mxu0 0.0
        %1189 = vmatpush1.msra.mxu0 0.0
        %1190 = vmatprep.subr.mxu0 0.0
        %1191 = vmatpush1.msra.mxu0 0.0
        %1192 = vmatprep.mubr.f32.mxu0 0.0
        %1193 = vmatmul.mubr.f32.gmra.mrb[0].mxu0 %v1126
        %v1194 = vpop.f32.mrb[0].mxu0
        %v1195 = vadd.f32 0.0, %v1194
        %v1196 = vpop.f32.mrb[0].mxu0
        %1197 = vdwg.mxu0
        %v1198 = vadd.f32 %v1115, %v1195
        %s1199 = scalar_lea.vmem %s1, 704
        %v1200 = vld [vmem:[%s1199] sm:$0xff]
        %v1201 = vld [vmem:[%s1199 + $0x8] sm:$0xff]
        %v1202 = vld [vmem:[%s1199 + $0x10] sm:$0xff]
        %v1203 = vld [vmem:[%s1199 + $0x18] sm:$0xff]
        %v1204 = vld [vmem:[%s1199 + $0x20] sm:$0xff]
        %v1205 = vld [vmem:[%s1199 + $0x28] sm:$0xff]
        %v1206 = vld [vmem:[%s1199 + $0x30] sm:$0xff]
        %v1207 = vld [vmem:[%s1199 + $0x38] sm:$0xff]
        %v1208 = vrot.slane %v278, 3
        %v1209 = vsel %vm298, %v1208, 0
        %1211 = vmatprep.subr.mxu0 0.0
        %1212 = vmatpush1.msra.mxu0 %v1200
        %1213 = vmatprep.subr.mxu0 0.0
        %1214 = vmatpush1.msra.mxu0 %v1201
        %1215 = vmatprep.subr.mxu0 0.0
        %1216 = vmatpush1.msra.mxu0 %v1202
        %1217 = vmatprep.subr.mxu0 0.0
        %1218 = vmatpush1.msra.mxu0 %v1203
        %1219 = vmatprep.subr.mxu0 0.0
        %1220 = vmatpush1.msra.mxu0 %v1204
        %1221 = vmatprep.subr.mxu0 0.0
        %1222 = vmatpush1.msra.mxu0 %v1205
        %1223 = vmatprep.subr.mxu0 0.0
        %1224 = vmatpush1.msra.mxu0 %v1206
        %1225 = vmatprep.subr.mxu0 0.0
        %1226 = vmatpush1.msra.mxu0 %v1207
        %1227 = vmatprep.subr.mxu0 0.0
        %1228 = vmatpush1.msra.mxu0 0.0
        %1229 = vmatprep.subr.mxu0 0.0
        %1230 = vmatpush1.msra.mxu0 0.0
        %1231 = vmatprep.subr.mxu0 0.0
        %1232 = vmatpush1.msra.mxu0 0.0
        %1233 = vmatprep.subr.mxu0 0.0
        %1234 = vmatpush1.msra.mxu0 0.0
        %1235 = vmatprep.subr.mxu0 0.0
        %1236 = vmatpush1.msra.mxu0 0.0
        %1237 = vmatprep.subr.mxu0 0.0
        %1238 = vmatpush1.msra.mxu0 0.0
        %1239 = vmatprep.subr.mxu0 0.0
        %1240 = vmatpush1.msra.mxu0 0.0
        %1241 = vmatprep.subr.mxu0 0.0
        %1242 = vmatpush1.msra.mxu0 0.0
        %1243 = vmatprep.subr.mxu0 0.0
        %1244 = vmatpush1.msra.mxu0 0.0
        %1245 = vmatprep.subr.mxu0 0.0
        %1246 = vmatpush1.msra.mxu0 0.0
        %1247 = vmatprep.subr.mxu0 0.0
        %1248 = vmatpush1.msra.mxu0 0.0
        %1249 = vmatprep.subr.mxu0 0.0
        %1250 = vmatpush1.msra.mxu0 0.0
        %1251 = vmatprep.subr.mxu0 0.0
        %1252 = vmatpush1.msra.mxu0 0.0
        %1253 = vmatprep.subr.mxu0 0.0
        %1254 = vmatpush1.msra.mxu0 0.0
        %1255 = vmatprep.subr.mxu0 0.0
        %1256 = vmatpush1.msra.mxu0 0.0
        %1257 = vmatprep.subr.mxu0 0.0
        %1258 = vmatpush1.msra.mxu0 0.0
        %1259 = vmatprep.subr.mxu0 0.0
        %1260 = vmatpush1.msra.mxu0 0.0
        %1261 = vmatprep.subr.mxu0 0.0
        %1262 = vmatpush1.msra.mxu0 0.0
        %1263 = vmatprep.subr.mxu0 0.0
        %1264 = vmatpush1.msra.mxu0 0.0
        %1265 = vmatprep.subr.mxu0 0.0
        %1266 = vmatpush1.msra.mxu0 0.0
        %1267 = vmatprep.subr.mxu0 0.0
        %1268 = vmatpush1.msra.mxu0 0.0
        %1269 = vmatprep.subr.mxu0 0.0
        %1270 = vmatpush1.msra.mxu0 0.0
        %1271 = vmatprep.subr.mxu0 0.0
        %1272 = vmatpush1.msra.mxu0 0.0
        %1273 = vmatprep.subr.mxu0 0.0
        %1274 = vmatpush1.msra.mxu0 0.0
        %1275 = vmatprep.mubr.f32.mxu0 0.0
        %1276 = vmatmul.mubr.f32.gmra.mrb[0].mxu0 %v1209
        %v1277 = vpop.f32.mrb[0].mxu0
        %v1278 = vadd.f32 0.0, %v1277
        %v1279 = vpop.f32.mrb[0].mxu0
        %1280 = vdwg.mxu0
        %v1281 = vadd.f32 %v1198, %v1278
        %s1282 = scalar_lea.vmem %s1, 768
        %v1283 = vld [vmem:[%s1282] sm:$0xff]
        %v1284 = vld [vmem:[%s1282 + $0x8] sm:$0xff]
        %v1285 = vld [vmem:[%s1282 + $0x10] sm:$0xff]
        %v1286 = vld [vmem:[%s1282 + $0x18] sm:$0xff]
        %v1287 = vld [vmem:[%s1282 + $0x20] sm:$0xff]
        %v1288 = vld [vmem:[%s1282 + $0x28] sm:$0xff]
        %v1289 = vld [vmem:[%s1282 + $0x30] sm:$0xff]
        %v1290 = vld [vmem:[%s1282 + $0x38] sm:$0xff]
        %v1291 = vrot.slane %v278, 4
        %v1292 = vsel %vm298, %v1291, 0
        %1294 = vmatprep.subr.mxu0 0.0
        %1295 = vmatpush1.msra.mxu0 %v1283
        %1296 = vmatprep.subr.mxu0 0.0
        %1297 = vmatpush1.msra.mxu0 %v1284
        %1298 = vmatprep.subr.mxu0 0.0
        %1299 = vmatpush1.msra.mxu0 %v1285
        %1300 = vmatprep.subr.mxu0 0.0
        %1301 = vmatpush1.msra.mxu0 %v1286
        %1302 = vmatprep.subr.mxu0 0.0
        %1303 = vmatpush1.msra.mxu0 %v1287
        %1304 = vmatprep.subr.mxu0 0.0
        %1305 = vmatpush1.msra.mxu0 %v1288
        %1306 = vmatprep.subr.mxu0 0.0
        %1307 = vmatpush1.msra.mxu0 %v1289
        %1308 = vmatprep.subr.mxu0 0.0
        %1309 = vmatpush1.msra.mxu0 %v1290
        %1310 = vmatprep.subr.mxu0 0.0
        %1311 = vmatpush1.msra.mxu0 0.0
        %1312 = vmatprep.subr.mxu0 0.0
        %1313 = vmatpush1.msra.mxu0 0.0
        %1314 = vmatprep.subr.mxu0 0.0
        %1315 = vmatpush1.msra.mxu0 0.0
        %1316 = vmatprep.subr.mxu0 0.0
        %1317 = vmatpush1.msra.mxu0 0.0
        %1318 = vmatprep.subr.mxu0 0.0
        %1319 = vmatpush1.msra.mxu0 0.0
        %1320 = vmatprep.subr.mxu0 0.0
        %1321 = vmatpush1.msra.mxu0 0.0
        %1322 = vmatprep.subr.mxu0 0.0
        %1323 = vmatpush1.msra.mxu0 0.0
        %1324 = vmatprep.subr.mxu0 0.0
        %1325 = vmatpush1.msra.mxu0 0.0
        %1326 = vmatprep.subr.mxu0 0.0
        %1327 = vmatpush1.msra.mxu0 0.0
        %1328 = vmatprep.subr.mxu0 0.0
        %1329 = vmatpush1.msra.mxu0 0.0
        %1330 = vmatprep.subr.mxu0 0.0
        %1331 = vmatpush1.msra.mxu0 0.0
        %1332 = vmatprep.subr.mxu0 0.0
        %1333 = vmatpush1.msra.mxu0 0.0
        %1334 = vmatprep.subr.mxu0 0.0
        %1335 = vmatpush1.msra.mxu0 0.0
        %1336 = vmatprep.subr.mxu0 0.0
        %1337 = vmatpush1.msra.mxu0 0.0
        %1338 = vmatprep.subr.mxu0 0.0
        %1339 = vmatpush1.msra.mxu0 0.0
        %1340 = vmatprep.subr.mxu0 0.0
        %1341 = vmatpush1.msra.mxu0 0.0
        %1342 = vmatprep.subr.mxu0 0.0
        %1343 = vmatpush1.msra.mxu0 0.0
        %1344 = vmatprep.subr.mxu0 0.0
        %1345 = vmatpush1.msra.mxu0 0.0
        %1346 = vmatprep.subr.mxu0 0.0
        %1347 = vmatpush1.msra.mxu0 0.0
        %1348 = vmatprep.subr.mxu0 0.0
        %1349 = vmatpush1.msra.mxu0 0.0
        %1350 = vmatprep.subr.mxu0 0.0
        %1351 = vmatpush1.msra.mxu0 0.0
        %1352 = vmatprep.subr.mxu0 0.0
        %1353 = vmatpush1.msra.mxu0 0.0
        %1354 = vmatprep.subr.mxu0 0.0
        %1355 = vmatpush1.msra.mxu0 0.0
        %1356 = vmatprep.subr.mxu0 0.0
        %1357 = vmatpush1.msra.mxu0 0.0
        %1358 = vmatprep.mubr.f32.mxu0 0.0
        %1359 = vmatmul.mubr.f32.gmra.mrb[0].mxu0 %v1292
        %v1360 = vpop.f32.mrb[0].mxu0
        %v1361 = vadd.f32 0.0, %v1360
        %v1362 = vpop.f32.mrb[0].mxu0
        %1363 = vdwg.mxu0
        %v1364 = vadd.f32 %v1281, %v1361
        %v1365 = vld [vmem:[%s2] sm:$0x1]
        %v1367 = vlaneseq
        %v1368 = vshrl.u32 %v1367, 7
        %v1369 = vsub.s32 0, %v1368
        %v1370 = vrot.slane %v1365, %v1369
        %v1372 = vadd.f32 %v1364, %v1370
        %vm1373 = vcmp.gt.f32.partialorder %v1372, 0.0
        %v1374 = vmul.f32 %v1372, 1.442695
        %v1375 = vpow.pop %v1374
        %v1376 = vsub.f32 %v1375, 1.0
        %v1377 = vsel %vm1373, %v1372, %v1376
        %v1378 = vld [vmem:[%s3] sm:$0xff]
        %v1379 = vld [vmem:[%s3 + $0x8] sm:$0xff]
        %v1380 = vld [vmem:[%s3 + $0x10] sm:$0xff]
        %v1381 = vld [vmem:[%s3 + $0x18] sm:$0xff]
        %v1382 = vld [vmem:[%s3 + $0x20] sm:$0xff]
        %v1383 = vld [vmem:[%s3 + $0x28] sm:$0xff]
        %v1384 = vld [vmem:[%s3 + $0x30] sm:$0xff]
        %v1385 = vld [vmem:[%s3 + $0x38] sm:$0xff]
        %v1386 = vld [vmem:[%s4] sm:$0x1]
        %v1388 = vlaneseq
        %v1389 = vshrl.u32 %v1388, 7
        %v1390 = vsub.s32 0, %v1389
        %v1391 = vrot.slane %v1386, %v1390
        %1393 = vmatprep.subr.mxu0 0.0
        %1394 = vmatpush1.msra.mxu0 %v1378
        %1395 = vmatprep.subr.mxu0 0.0
        %1396 = vmatpush1.msra.mxu0 %v1379
        %1397 = vmatprep.subr.mxu0 0.0
        %1398 = vmatpush1.msra.mxu0 %v1380
        %1399 = vmatprep.subr.mxu0 0.0
        %1400 = vmatpush1.msra.mxu0 %v1381
        %1401 = vmatprep.subr.mxu0 0.0
        %1402 = vmatpush1.msra.mxu0 %v1382
        %1403 = vmatprep.subr.mxu0 0.0
        %1404 = vmatpush1.msra.mxu0 %v1383
        %1405 = vmatprep.subr.mxu0 0.0
        %1406 = vmatpush1.msra.mxu0 %v1384
        %1407 = vmatprep.subr.mxu0 0.0
        %1408 = vmatpush1.msra.mxu0 %v1385
        %1409 = vmatprep.subr.mxu0 0.0
        %1410 = vmatpush1.msra.mxu0 0.0
        %1411 = vmatprep.subr.mxu0 0.0
        %1412 = vmatpush1.msra.mxu0 0.0
        %1413 = vmatprep.subr.mxu0 0.0
        %1414 = vmatpush1.msra.mxu0 0.0
        %1415 = vmatprep.subr.mxu0 0.0
        %1416 = vmatpush1.msra.mxu0 0.0
        %1417 = vmatprep.subr.mxu0 0.0
        %1418 = vmatpush1.msra.mxu0 0.0
        %1419 = vmatprep.subr.mxu0 0.0
        %1420 = vmatpush1.msra.mxu0 0.0
        %1421 = vmatprep.subr.mxu0 0.0
        %1422 = vmatpush1.msra.mxu0 0.0
        %1423 = vmatprep.subr.mxu0 0.0
        %1424 = vmatpush1.msra.mxu0 0.0
        %1425 = vmatprep.subr.mxu0 0.0
        %1426 = vmatpush1.msra.mxu0 0.0
        %1427 = vmatprep.subr.mxu0 0.0
        %1428 = vmatpush1.msra.mxu0 0.0
        %1429 = vmatprep.subr.mxu0 0.0
        %1430 = vmatpush1.msra.mxu0 0.0
        %1431 = vmatprep.subr.mxu0 0.0
        %1432 = vmatpush1.msra.mxu0 0.0
        %1433 = vmatprep.subr.mxu0 0.0
        %1434 = vmatpush1.msra.mxu0 0.0
        %1435 = vmatprep.subr.mxu0 0.0
        %1436 = vmatpush1.msra.mxu0 0.0
        %1437 = vmatprep.subr.mxu0 0.0
        %1438 = vmatpush1.msra.mxu0 0.0
        %1439 = vmatprep.subr.mxu0 0.0
        %1440 = vmatpush1.msra.mxu0 0.0
        %1441 = vmatprep.subr.mxu0 0.0
        %1442 = vmatpush1.msra.mxu0 0.0
        %1443 = vmatprep.subr.mxu0 0.0
        %1444 = vmatpush1.msra.mxu0 0.0
        %1445 = vmatprep.subr.mxu0 0.0
        %1446 = vmatpush1.msra.mxu0 0.0
        %1447 = vmatprep.subr.mxu0 0.0
        %1448 = vmatpush1.msra.mxu0 0.0
        %1449 = vmatprep.subr.mxu0 0.0
        %1450 = vmatpush1.msra.mxu0 0.0
        %1451 = vmatprep.subr.mxu0 0.0
        %1452 = vmatpush1.msra.mxu0 0.0
        %1453 = vmatprep.subr.mxu0 0.0
        %1454 = vmatpush1.msra.mxu0 0.0
        %1455 = vmatprep.subr.mxu0 0.0
        %1456 = vmatpush1.msra.mxu0 0.0
        %1457 = vmatprep.mubr.f32.mxu0 0.0
        %1458 = vmatmul.mubr.f32.gmra.mrb[0].mxu0 %v371
        %v1459 = vpop.f32.mrb[0].mxu0
        %v1460 = vadd.f32 %v1391, %v1459
        %v1461 = vpop.f32.mrb[0].mxu0
        %1462 = vmatprep.mubr.f32.mxu0 0.0
        %1463 = vmatmul.mubr.f32.gmra.mrb[0].mxu0 %v960
        %v1464 = vpop.f32.mrb[0].mxu0
        %v1465 = vadd.f32 %v1391, %v1464
        %v1466 = vpop.f32.mrb[0].mxu0
        %1467 = vdwg.mxu0
        %1470 = vrot.lane.b32.xlu0 %v1460, 4
        %v1471 = vpop.permute.xlu0 %1470
        %1472 = vrot.lane.b32.xlu0 %v1465, 4
        %v1473 = vpop.permute.xlu0 %1472
        %vm1476 = vcmask 31744
        %v1477 = vsel %vm1476, 0.0, %v1471
        %v1478 = vsel %vm1476, 0.0, %v1473
        %vm1479 = vcmask 556032
        %v1480 = vsel %vm1479, %v1477, 0.0
        %v1481 = vsel %vm1479, %v1478, 0.0
        %v1484 = vrot.slane %v1480, 7
        %v1485 = vrot.slane %v1481, 7
        %v1486 = vsel %vm874, %v1484, %v1485
        %v1489 = vsel %vm874, 0.0, %v1484
        %v1490 = vsel %vm874, %v1485, 0.0
        %v1491 = vld [vmem:[%s5] sm:$0xff]
        %v1492 = vld [vmem:[%s5 + $0x8] sm:$0xff]
        %v1493 = vld [vmem:[%s5 + $0x10] sm:$0xff]
        %v1494 = vld [vmem:[%s5 + $0x18] sm:$0xff]
        %v1495 = vld [vmem:[%s5 + $0x20] sm:$0xff]
        %v1496 = vld [vmem:[%s5 + $0x28] sm:$0xff]
        %v1497 = vld [vmem:[%s5 + $0x30] sm:$0xff]
        %v1498 = vld [vmem:[%s5 + $0x38] sm:$0xff]
        %v1499 = vld [vmem:[%s5 + $0x40] sm:$0xff]
        %s1500 = scalar_lea.vmem %s5, 72
        %v1501 = vld [vmem:[%s1500] sm:$0xff]
        %v1502 = vld [vmem:[%s1500 + $0x8] sm:$0xff]
        %v1503 = vld [vmem:[%s1500 + $0x10] sm:$0xff]
        %v1504 = vld [vmem:[%s1500 + $0x18] sm:$0xff]
        %v1505 = vld [vmem:[%s1500 + $0x20] sm:$0xff]
        %v1506 = vld [vmem:[%s1500 + $0x28] sm:$0xff]
        %v1507 = vld [vmem:[%s1500 + $0x30] sm:$0xff]
        %v1508 = vld [vmem:[%s1500 + $0x38] sm:$0xff]
        %v1509 = vld [vmem:[%s1500 + $0x40] sm:$0xff]
        %vm1512 = vcmask 1046528
        %v1513 = vrot.slane %v1489, 1
        %v1514 = vrot.slane %v1486, 1
        %v1515 = vsel %vm1512, %v1513, %v1514
        %v1516 = vrot.slane %v1490, 1
        %v1517 = vsel %vm1512, %v1514, %v1516
        %vm1518 = vcmask 588800
        %v1519 = vsel %vm1518, %v1515, 0
        %v1521 = vsel %vm1518, %v1517, 0
        %1523 = vmatprep.subr.mxu0 0.0
        %1524 = vmatpush1.msra.mxu0 %v1501
        %1525 = vmatprep.subr.mxu0 0.0
        %1526 = vmatpush1.msra.mxu0 %v1502
        %1527 = vmatprep.subr.mxu0 0.0
        %1528 = vmatpush1.msra.mxu0 %v1503
        %1529 = vmatprep.subr.mxu0 0.0
        %1530 = vmatpush1.msra.mxu0 %v1504
        %1531 = vmatprep.subr.mxu0 0.0
        %1532 = vmatpush1.msra.mxu0 %v1505
        %1533 = vmatprep.subr.mxu0 0.0
        %1534 = vmatpush1.msra.mxu0 %v1506
        %1535 = vmatprep.subr.mxu0 0.0
        %1536 = vmatpush1.msra.mxu0 %v1507
        %1537 = vmatprep.subr.mxu0 0.0
        %1538 = vmatpush1.msra.mxu0 %v1508
        %1539 = vmatprep.subr.mxu0 0.0
        %1540 = vmatpush1.msra.mxu0 %v1509
        %1541 = vmatprep.subr.mxu0 0.0
        %1542 = vmatpush1.msra.mxu0 0.0
        %1543 = vmatprep.subr.mxu0 0.0
        %1544 = vmatpush1.msra.mxu0 0.0
        %1545 = vmatprep.subr.mxu0 0.0
        %1546 = vmatpush1.msra.mxu0 0.0
        %1547 = vmatprep.subr.mxu0 0.0
        %1548 = vmatpush1.msra.mxu0 0.0
        %1549 = vmatprep.subr.mxu0 0.0
        %1550 = vmatpush1.msra.mxu0 0.0
        %1551 = vmatprep.subr.mxu0 0.0
        %1552 = vmatpush1.msra.mxu0 0.0
        %1553 = vmatprep.subr.mxu0 0.0
        %1554 = vmatpush1.msra.mxu0 0.0
        %1555 = vmatprep.subr.mxu0 0.0
        %1556 = vmatpush1.msra.mxu0 0.0
        %1557 = vmatprep.subr.mxu0 0.0
        %1558 = vmatpush1.msra.mxu0 0.0
        %1559 = vmatprep.subr.mxu0 0.0
        %1560 = vmatpush1.msra.mxu0 0.0
        %1561 = vmatprep.subr.mxu0 0.0
        %1562 = vmatpush1.msra.mxu0 0.0
        %1563 = vmatprep.subr.mxu0 0.0
        %1564 = vmatpush1.msra.mxu0 0.0
        %1565 = vmatprep.subr.mxu0 0.0
        %1566 = vmatpush1.msra.mxu0 0.0
        %1567 = vmatprep.subr.mxu0 0.0
        %1568 = vmatpush1.msra.mxu0 0.0
        %1569 = vmatprep.subr.mxu0 0.0
        %1570 = vmatpush1.msra.mxu0 0.0
        %1571 = vmatprep.subr.mxu0 0.0
        %1572 = vmatpush1.msra.mxu0 0.0
        %1573 = vmatprep.subr.mxu0 0.0
        %1574 = vmatpush1.msra.mxu0 0.0
        %1575 = vmatprep.subr.mxu0 0.0
        %1576 = vmatpush1.msra.mxu0 0.0
        %1577 = vmatprep.subr.mxu0 0.0
        %1578 = vmatpush1.msra.mxu0 0.0
        %1579 = vmatprep.subr.mxu0 0.0
        %1580 = vmatpush1.msra.mxu0 0.0
        %1581 = vmatprep.subr.mxu0 0.0
        %1582 = vmatpush1.msra.mxu0 0.0
        %1583 = vmatprep.subr.mxu0 0.0
        %1584 = vmatpush1.msra.mxu0 0.0
        %1585 = vmatprep.subr.mxu0 0.0
        %1586 = vmatpush1.msra.mxu0 0.0
        %1587 = vmatprep.mubr.f32.mxu0 0.0
        %1588 = vmatmul.mubr.f32.gmra.mrb[0].mxu0 %v1519
        %v1589 = vpop.f32.mrb[0].mxu0
        %v1590 = vadd.f32 0.0, %v1589
        %v1591 = vpop.f32.mrb[0].mxu0
        %1592 = vmatprep.mubr.f32.mxu0 0.0
        %1593 = vmatmul.mubr.f32.gmra.mrb[0].mxu0 %v1521
        %v1594 = vpop.f32.mrb[0].mxu0
        %v1595 = vadd.f32 0.0, %v1594
        %v1596 = vpop.f32.mrb[0].mxu0
        %1597 = vdwg.mxu0
        %v1598 = vsel %vm1518, %v1489, 0
        %v1600 = vsel %vm1518, %v1486, 0
        %1602 = vmatprep.subr.mxu0 0.0
        %1603 = vmatpush1.msra.mxu0 %v1491
        %1604 = vmatprep.subr.mxu0 0.0
        %1605 = vmatpush1.msra.mxu0 %v1492
        %1606 = vmatprep.subr.mxu0 0.0
        %1607 = vmatpush1.msra.mxu0 %v1493
        %1608 = vmatprep.subr.mxu0 0.0
        %1609 = vmatpush1.msra.mxu0 %v1494
        %1610 = vmatprep.subr.mxu0 0.0
        %1611 = vmatpush1.msra.mxu0 %v1495
        %1612 = vmatprep.subr.mxu0 0.0
        %1613 = vmatpush1.msra.mxu0 %v1496
        %1614 = vmatprep.subr.mxu0 0.0
        %1615 = vmatpush1.msra.mxu0 %v1497
        %1616 = vmatprep.subr.mxu0 0.0
        %1617 = vmatpush1.msra.mxu0 %v1498
        %1618 = vmatprep.subr.mxu0 0.0
        %1619 = vmatpush1.msra.mxu0 %v1499
        %1620 = vmatprep.subr.mxu0 0.0
        %1621 = vmatpush1.msra.mxu0 0.0
        %1622 = vmatprep.subr.mxu0 0.0
        %1623 = vmatpush1.msra.mxu0 0.0
        %1624 = vmatprep.subr.mxu0 0.0
        %1625 = vmatpush1.msra.mxu0 0.0
        %1626 = vmatprep.subr.mxu0 0.0
        %1627 = vmatpush1.msra.mxu0 0.0
        %1628 = vmatprep.subr.mxu0 0.0
        %1629 = vmatpush1.msra.mxu0 0.0
        %1630 = vmatprep.subr.mxu0 0.0
        %1631 = vmatpush1.msra.mxu0 0.0
        %1632 = vmatprep.subr.mxu0 0.0
        %1633 = vmatpush1.msra.mxu0 0.0
        %1634 = vmatprep.subr.mxu0 0.0
        %1635 = vmatpush1.msra.mxu0 0.0
        %1636 = vmatprep.subr.mxu0 0.0
        %1637 = vmatpush1.msra.mxu0 0.0
        %1638 = vmatprep.subr.mxu0 0.0
        %1639 = vmatpush1.msra.mxu0 0.0
        %1640 = vmatprep.subr.mxu0 0.0
        %1641 = vmatpush1.msra.mxu0 0.0
        %1642 = vmatprep.subr.mxu0 0.0
        %1643 = vmatpush1.msra.mxu0 0.0
        %1644 = vmatprep.subr.mxu0 0.0
        %1645 = vmatpush1.msra.mxu0 0.0
        %1646 = vmatprep.subr.mxu0 0.0
        %1647 = vmatpush1.msra.mxu0 0.0
        %1648 = vmatprep.subr.mxu0 0.0
        %1649 = vmatpush1.msra.mxu0 0.0
        %1650 = vmatprep.subr.mxu0 0.0
        %1651 = vmatpush1.msra.mxu0 0.0
        %1652 = vmatprep.subr.mxu0 0.0
        %1653 = vmatpush1.msra.mxu0 0.0
        %1654 = vmatprep.subr.mxu0 0.0
        %1655 = vmatpush1.msra.mxu0 0.0
        %1656 = vmatprep.subr.mxu0 0.0
        %1657 = vmatpush1.msra.mxu0 0.0
        %1658 = vmatprep.subr.mxu0 0.0
        %1659 = vmatpush1.msra.mxu0 0.0
        %1660 = vmatprep.subr.mxu0 0.0
        %1661 = vmatpush1.msra.mxu0 0.0
        %1662 = vmatprep.subr.mxu0 0.0
        %1663 = vmatpush1.msra.mxu0 0.0
        %1664 = vmatprep.subr.mxu0 0.0
        %1665 = vmatpush1.msra.mxu0 0.0
        %1666 = vmatprep.mubr.f32.mxu0 0.0
        %1667 = vmatmul.mubr.f32.gmra.mrb[0].mxu0 %v1598
        %v1668 = vpop.f32.mrb[0].mxu0
        %v1669 = vadd.f32 %v1590, %v1668
        %v1670 = vpop.f32.mrb[0].mxu0
        %1671 = vmatprep.mubr.f32.mxu0 0.0
        %1672 = vmatmul.mubr.f32.gmra.mrb[0].mxu0 %v1600
        %v1673 = vpop.f32.mrb[0].mxu0
        %v1674 = vadd.f32 %v1595, %v1673
        %v1675 = vpop.f32.mrb[0].mxu0
        %1676 = vdwg.mxu0
        %s1677 = scalar_lea.vmem %s5, 144
        %v1678 = vld [vmem:[%s1677] sm:$0xff]
        %v1679 = vld [vmem:[%s1677 + $0x8] sm:$0xff]
        %v1680 = vld [vmem:[%s1677 + $0x10] sm:$0xff]
        %v1681 = vld [vmem:[%s1677 + $0x18] sm:$0xff]
        %v1682 = vld [vmem:[%s1677 + $0x20] sm:$0xff]
        %v1683 = vld [vmem:[%s1677 + $0x28] sm:$0xff]
        %v1684 = vld [vmem:[%s1677 + $0x30] sm:$0xff]
        %v1685 = vld [vmem:[%s1677 + $0x38] sm:$0xff]
        %v1686 = vld [vmem:[%s1677 + $0x40] sm:$0xff]
        %vm1687 = vcmask 1045504
        %v1688 = vrot.slane %v1489, 2
        %v1689 = vrot.slane %v1486, 2
        %v1690 = vsel %vm1687, %v1688, %v1689
        %v1691 = vrot.slane %v1490, 2
        %v1692 = vsel %vm1687, %v1689, %v1691
        %v1693 = vsel %vm1518, %v1690, 0
        %v1695 = vsel %vm1518, %v1692, 0
        %1697 = vmatprep.subr.mxu0 0.0
        %1698 = vmatpush1.msra.mxu0 %v1678
        %1699 = vmatprep.subr.mxu0 0.0
        %1700 = vmatpush1.msra.mxu0 %v1679
        %1701 = vmatprep.subr.mxu0 0.0
        %1702 = vmatpush1.msra.mxu0 %v1680
        %1703 = vmatprep.subr.mxu0 0.0
        %1704 = vmatpush1.msra.mxu0 %v1681
        %1705 = vmatprep.subr.mxu0 0.0
        %1706 = vmatpush1.msra.mxu0 %v1682
        %1707 = vmatprep.subr.mxu0 0.0
        %1708 = vmatpush1.msra.mxu0 %v1683
        %1709 = vmatprep.subr.mxu0 0.0
        %1710 = vmatpush1.msra.mxu0 %v1684
        %1711 = vmatprep.subr.mxu0 0.0
        %1712 = vmatpush1.msra.mxu0 %v1685
        %1713 = vmatprep.subr.mxu0 0.0
        %1714 = vmatpush1.msra.mxu0 %v1686
        %1715 = vmatprep.subr.mxu0 0.0
        %1716 = vmatpush1.msra.mxu0 0.0
        %1717 = vmatprep.subr.mxu0 0.0
        %1718 = vmatpush1.msra.mxu0 0.0
        %1719 = vmatprep.subr.mxu0 0.0
        %1720 = vmatpush1.msra.mxu0 0.0
        %1721 = vmatprep.subr.mxu0 0.0
        %1722 = vmatpush1.msra.mxu0 0.0
        %1723 = vmatprep.subr.mxu0 0.0
        %1724 = vmatpush1.msra.mxu0 0.0
        %1725 = vmatprep.subr.mxu0 0.0
        %1726 = vmatpush1.msra.mxu0 0.0
        %1727 = vmatprep.subr.mxu0 0.0
        %1728 = vmatpush1.msra.mxu0 0.0
        %1729 = vmatprep.subr.mxu0 0.0
        %1730 = vmatpush1.msra.mxu0 0.0
        %1731 = vmatprep.subr.mxu0 0.0
        %1732 = vmatpush1.msra.mxu0 0.0
        %1733 = vmatprep.subr.mxu0 0.0
        %1734 = vmatpush1.msra.mxu0 0.0
        %1735 = vmatprep.subr.mxu0 0.0
        %1736 = vmatpush1.msra.mxu0 0.0
        %1737 = vmatprep.subr.mxu0 0.0
        %1738 = vmatpush1.msra.mxu0 0.0
        %1739 = vmatprep.subr.mxu0 0.0
        %1740 = vmatpush1.msra.mxu0 0.0
        %1741 = vmatprep.subr.mxu0 0.0
        %1742 = vmatpush1.msra.mxu0 0.0
        %1743 = vmatprep.subr.mxu0 0.0
        %1744 = vmatpush1.msra.mxu0 0.0
        %1745 = vmatprep.subr.mxu0 0.0
        %1746 = vmatpush1.msra.mxu0 0.0
        %1747 = vmatprep.subr.mxu0 0.0
        %1748 = vmatpush1.msra.mxu0 0.0
        %1749 = vmatprep.subr.mxu0 0.0
        %1750 = vmatpush1.msra.mxu0 0.0
        %1751 = vmatprep.subr.mxu0 0.0
        %1752 = vmatpush1.msra.mxu0 0.0
        %1753 = vmatprep.subr.mxu0 0.0
        %1754 = vmatpush1.msra.mxu0 0.0
        %1755 = vmatprep.subr.mxu0 0.0
        %1756 = vmatpush1.msra.mxu0 0.0
        %1757 = vmatprep.subr.mxu0 0.0
        %1758 = vmatpush1.msra.mxu0 0.0
        %1759 = vmatprep.subr.mxu0 0.0
        %1760 = vmatpush1.msra.mxu0 0.0
        %1761 = vmatprep.mubr.f32.mxu0 0.0
        %1762 = vmatmul.mubr.f32.gmra.mrb[0].mxu0 %v1693
        %v1763 = vpop.f32.mrb[0].mxu0
        %v1764 = vadd.f32 0.0, %v1763
        %v1765 = vpop.f32.mrb[0].mxu0
        %1766 = vmatprep.mubr.f32.mxu0 0.0
        %1767 = vmatmul.mubr.f32.gmra.mrb[0].mxu0 %v1695
        %v1768 = vpop.f32.mrb[0].mxu0
        %v1769 = vadd.f32 0.0, %v1768
        %v1770 = vpop.f32.mrb[0].mxu0
        %1771 = vdwg.mxu0
        %v1772 = vadd.f32 %v1669, %v1764
        %v1773 = vadd.f32 %v1674, %v1769
        %v1774 = vld [vmem:[%s6] sm:$0x1]
        %v1776 = vlaneseq
        %v1777 = vshrl.u32 %v1776, 7
        %v1778 = vsub.s32 0, %v1777
        %v1779 = vrot.slane %v1774, %v1778
        %v1781 = vadd.f32 %v1772, %v1779
        %v1782 = vadd.f32 %v1773, %v1779
        %vm1783 = vcmp.gt.f32.partialorder %v1781, 0.0
        %vm1784 = vcmp.gt.f32.partialorder %v1782, 0.0
        %v1785 = vmul.f32 %v1781, 1.442695
        %v1786 = vpow.pop %v1785
        %v1787 = vmul.f32 %v1782, 1.442695
        %v1788 = vpow.pop %v1787
        %v1789 = vsub.f32 %v1786, 1.0
        %v1790 = vsub.f32 %v1788, 1.0
        %v1791 = vsel %vm1783, %v1781, %v1789
        %v1792 = vsel %vm1784, %v1782, %v1790
        %1794 = vrot.lane.b32.xlu0 %v1377, 48
        %v1795 = vpop.permute.xlu0 %1794
        %vm1797 = vcmask 392192
        %v1798 = vsel %vm1797, 0.0, %v1795
        %vm1799 = vcmask 654336
        %v1800 = vsel %vm1799, %v1798, 0.0
        %v1802 = vrot.slane %v1800, 2
        %v1804 = vsel %vm1687, 0.0, %v1802
        %v1805 = vsel %vm788, %v1802, 0.0
        %v1806 = vadd.f32 %v1791, %v1804
        %v1807 = vadd.f32 %v1792, %v1805
        %1808 = vst [vmem:[%s271] sm:$0xff] %v1806
        %1809 = vst [vmem:[%s271 + $0x8] sm:$0xff] %v1807
        %s1810 = sand.u32 %s181, 1
        %s1811 = scalar_lea.sflag [#allocation3], %s1810
        %s1812 = sand.u32 %s181, 1
        %s1813 = smul.addr %s1812, 16
        %s1814 = scalar_lea.vmem [#allocation2], %s1813
        // Predicated region
        $region49: #{tpu_custom_call.1} parent=47 // pred_check
          %p1815 = pneg %p191
        $region50: #{tpu_custom_call.1} parent=47 // pred_check_branch
          %1817 = sbr.rel (%p1815) target = $region52
        $region51: #{tpu_custom_call.1} parent=47 // pred_region
          %s1819 = ssub.s32 256, 256
          %1820 = vsyncadd %s1811, %s1819
          %s1821 = smul.addr %s21, 2
          %s1822 = smul.addr %s1821, 128
          %s1823 = scalar_lea.hbm %s7, %s1822
          %s1824 = sshll.u32 %s1814, 4
          %s1825 = int_to_ptr.vmem [resolvable:$true] %s1824
          %1830 = dma.vmem_to_hbm [thread:$0]  %s1825, 256, %s1823, %s1811, 128, 128, 8
        $region52: #{tpu_custom_call.1} parent=47 // pred_fallthru
          _
      $region48: #{tpu_custom_call.1} parent=5 // pred_fallthru
        _
      %p1831 = scmp.le.s32.totalorder 2, %s16
      // Predicated region
      $region53: #{tpu_custom_call.1} parent=5 // pred_check
        %p1832 = pneg %p1831
      $region54: #{tpu_custom_call.1} parent=5 // pred_check_branch
        %1834 = sbr.rel (%p1832) target = $region56
      $region55: #{tpu_custom_call.1} parent=5 // pred_region
        %s1835 = ssub.s32 %s16, 2
        // Predicated region
        $region57: #{tpu_custom_call.1} parent=55 // pred_check
          %p1836 = pneg %p197
        $region58: #{tpu_custom_call.1} parent=55 // pred_check_branch
          %1838 = sbr.rel (%p1836) target = $region60
        $region59: #{tpu_custom_call.1} parent=55 // pred_region
          %s1839 = sand.u32 %s182, 1
          %s1840 = scalar_lea.sflag [#allocation3], %s1839
          %s1841 = sand.u32 %s182, 1
          %s1842 = smul.addr %s1841, 16
          %s1843 = scalar_lea.vmem [#allocation2], %s1842
          %1844 = dma.done %s1840, 256
        $region60: #{tpu_custom_call.1} parent=55 // pred_fallthru
          _
      $region56: #{tpu_custom_call.1} parent=5 // pred_fallthru
        _
    $region6: #{tpu_custom_call.1} parent=1 // loop_footer
      %s20 = sadd.s32 1, %s16
    $region7: #{tpu_custom_call.1} parent=1 // loop_footer_branch
      %15 = sbr.rel target = $region3
    $region8: #{tpu_custom_call.1} parent=1 // loop_exit
      _
    %1845 = vsyncpa [#allocation3], 1
    %s1846 = scalar_lea.sflag [#allocation3], 1
    %1847 = vsyncpa %s1846, 1

</llo_original>
